<compile_context>
chip_gen: v7x
topology: tpu7x:2x2x1
jax: 0.10.0
libtpu: 0.0.40
codegen_flags: <defaults>
</compile_context>

<pallas_src>
import jax
import jax.numpy as jnp
from jax.experimental import pallas as pl
from jax.experimental.pallas import tpu as pltpu


def _round_up(x, m):
    return (x + m - 1) // m * m


# ------------------------------ Pallas kernel --------------------------------
def _flownet_fused_kernel(seg_ref, mask_ref, z0_ref, cond_ref,
                          bias_ref, esc_ref, wt_ref,
                          w1a_ref, w1b_ref, b1_ref, w2_ref, b2_ref,
                          w3s_ref, b3s_ref, w3c_ref, b3c_ref,
                          zo_ref, ldo_ref,
                          z_acc, ld_acc):
    """One grid step == one FlowStep; the grid axis k runs over the K fused steps."""
    f32 = jnp.float32
    k = pl.program_id(0)

    # ---- init resident state (z and per-batch logdet live in VMEM across K) --
    @pl.when(k == 0)
    def _init():
        z_acc[...] = z0_ref[...]
        ld_acc[...] = jnp.zeros_like(ld_acc)

    z = z_acc[...]

    # ---- ActNorm2d (center then scale).  Its logdet term T*sum(logs) is a
    #      per-step constant folded in on the host side.
    z = (z + bias_ref[...]) * esc_ref[...]

    # ---- InvertibleConv1x1: per-timestep channel mix z[t,:] <- W @ z[t,:].
    #      wt_ref holds W^T zero-padded to (Cp,Cp); logdet term T*log|det W|
    #      is also folded in on the host side.
    z = jnp.dot(z, wt_ref[...], preferred_element_type=f32)

    # ---- affine coupling, f = FF(Linear, ReLU, Linear, ReLU, LinearZeroInit).
    #      concat(z1, cond) @ W1  ==  z @ W1a_pad + cond @ W1b_pad, because the
    #      rows of W1a_pad belonging to z2 / lane padding are exactly zero.
    cond = cond_ref[...]
    h = (jnp.dot(z, w1a_ref[...], preferred_element_type=f32)
         + jnp.dot(cond, w1b_ref[...], preferred_element_type=f32)
         + b1_ref[...])
    h = jnp.maximum(h, 0.0)
    h = jnp.dot(h, w2_ref[...], preferred_element_type=f32) + b2_ref[...]
    h = jnp.maximum(h, 0.0)
    # split_feature(h, 'cross'): even output channels = shift, odd = scale; the
    # de-interleave + placement at the z2 column offset is baked into w3s/w3c.
    shift = jnp.dot(h, w3s_ref[...], preferred_element_type=f32) + b3s_ref[...]
    pre = jnp.dot(h, w3c_ref[...], preferred_element_type=f32) + b3c_ref[...]
    scale = jax.nn.sigmoid(pre + 2.0) + 1e-6
    # mask = 1 on z2 columns, 0 on z1/padding columns -> scale := 1 there and
    # shift is already 0 there, so  z_new = (z + shift) * scale  updates only
    # the z2 half and leaves z1 (and padded lanes) untouched: one dense store,
    # no lane slicing, no concatenate.
    scale = 1.0 + mask_ref[...] * (scale - 1.0)
    z = (z + shift) * scale

    # ---- per-batch logdet += sum over (C2, T) of log(scale).  log(1)=0 kills
    #      masked columns; the 0/1 seg matrix maps rows -> batch and zeroes
    #      padded rows.  (Bp, BTp) @ (BTp, Cp) keeps the MXU output lane-dense.
    per_batch = jnp.dot(seg_ref[...], jnp.log(scale), preferred_element_type=f32)
    ld = ld_acc[...] + jnp.sum(per_batch, axis=-1, keepdims=True)     # (Bp, 1)

    z_acc[...] = z
    ld_acc[...] = ld

    # ---- only the final flow step writes the results back to HBM ------------
    @pl.when(k == pl.num_programs(0) - 1)
    def _finalize():
        zo_ref[...] = z.astype(zo_ref.dtype)
        ldo_ref[...] = ld


# ----------------------------- host-side packing ------------------------------
def _pack_flow_params(params_list, C, H, N, T):
    """Zero-pad all per-step params to lane-dense widths, fold the z1/cond
    concat and the 'cross' split into the weight layouts, stack over K, and
    precompute the batch-independent logdet constant."""
    C1, C2 = C // 2, C - C // 2
    Cp, Hp, Np = _round_up(C, 128), _round_up(H, 128), _round_up(N, 128)

    def place(rows, cols, a, r0=0, c0=0, fill=0.0):
        out = jnp.full((rows, cols), fill, jnp.float32)
        return out.at[r0:r0 + a.shape[0], c0:c0 + a.shape[1]].set(a)

    names = ("bias", "esc", "wt", "w1a", "w1b", "b1", "w2", "b2",
             "w3s", "b3s", "w3c", "b3c")
    acc = {n: [] for n in names}
    const = jnp.zeros((), jnp.float32)
    for p in params_list:
        w1, w3 = p["w1"], p["w3"]
        acc["bias"].append(place(1, Cp, p["bias"][None, :]))
        acc["esc"].append(place(1, Cp, jnp.exp(p["logs"])[None, :], fill=1.0))
        acc["wt"].append(place(Cp, Cp, p["w"].T))
        acc["w1a"].append(place(Cp, Hp, w1[:C1]))                 # rows >= C1 zero
        acc["w1b"].append(place(Np, Hp, w1[C1:]))
        acc["b1"].append(place(1, Hp, p["b1"][None, :]))
        acc["w2"].append(place(Hp, Hp, p["w2"]))
        acc["b2"].append(place(1, Hp, p["b2"][None, :]))
        acc["w3s"].append(place(Hp, Cp, w3[:, 0::2], c0=C1))      # even cols -> shift
        acc["b3s"].append(place(1, Cp, p["b3"][None, 0::2], c0=C1))
        acc["w3c"].append(place(Hp, Cp, w3[:, 1::2], c0=C1))      # odd cols -> scale
        acc["b3c"].append(place(1, Cp, p["b3"][None, 1::2], c0=C1))
        # ActNorm + invconv logdet terms are batch independent: add on host.
        const = const + T * (jnp.sum(p["logs"]) + jnp.linalg.slogdet(p["w"])[1])
    packed = {n: jnp.stack(v) for n, v in acc.items()}
    return packed, const, (Cp, Hp, Np)


def flownet_forward(z_nct, cond_nct, params_list, logdet=0.0):
    """FlowNet.forward(z, cond, logdet, reverse=False) -> (z, logdet).
    z: (B, C, T), cond: (B, N, T)  (PyTorch NCW layout)."""
    B, C, T = z_nct.shape
    N = cond_nct.shape[1]
    H = params_list[0]["w2"].shape[0]
    K = len(params_list)
    C1, C2 = C // 2, C - C // 2

    packed, const, (Cp, Hp, Np) = _pack_flow_params(params_list, C, H, N, T)

    BT = B * T
    BTp = _round_up(BT, 8)
    Bp = _round_up(B, 8)

    # channels-last, batch folded into rows, zero-padded to lane-dense widths.
    z2d = jnp.transpose(z_nct, (0, 2, 1)).reshape(BT, C).astype(jnp.float32)
    c2d = jnp.transpose(cond_nct, (0, 2, 1)).reshape(BT, N).astype(jnp.float32)
    z_p = jnp.zeros((BTp, Cp), jnp.float32).at[:BT, :C].set(z2d)
    c_p = jnp.zeros((BTp, Np), jnp.float32).at[:BT, :N].set(c2d)

    # row -> batch one-hot selector (padded rows select no real batch).
    seg = (jnp.arange(BTp)[None, :] // T == jnp.arange(Bp)[:, None]
           ).astype(jnp.float32)
    # 1 on the z2 channel columns, 0 on z1 / padding columns.
    mask = jnp.zeros((1, Cp), jnp.float32).at[0, C1:C1 + C2].set(1.0)

    rep = lambda shape: pl.BlockSpec(shape, lambda k: (0,) * len(shape))
    wspec = lambda r, c: pl.BlockSpec((None, r, c), lambda k: (k, 0, 0))

    in_specs = [
        rep((Bp, BTp)),          # seg: row -> batch selector
        rep((1, Cp)),            # z2 column mask
        rep((BTp, Cp)),          # z (read at k == 0 only)
        rep((BTp, Np)),          # cond (resident across K)
        wspec(1, Cp),            # actnorm bias
        wspec(1, Cp),            # actnorm exp(logs)
        wspec(Cp, Cp),           # invconv W^T
        wspec(Cp, Hp),           # W1 rows for z1 (z2/pad rows zeroed)
        wspec(Np, Hp),           # W1 rows for cond
        wspec(1, Hp),            # b1
        wspec(Hp, Hp),           # W2
        wspec(1, Hp),            # b2
        wspec(Hp, Cp),           # W3 shift columns (placed at z2 offset)
        wspec(1, Cp),            # b3 shift
        wspec(Hp, Cp),           # W3 scale columns
        wspec(1, Cp),            # b3 scale
    ]
    out_specs = [rep((BTp, Cp)), rep((Bp, 1))]
    out_shape = [jax.ShapeDtypeStruct((BTp, Cp), jnp.float32),
                 jax.ShapeDtypeStruct((Bp, 1), jnp.float32)]

    zo, ldo = pl.pallas_call(
        _flownet_fused_kernel,
        grid=(K,),                          # K flow steps, sequential dependency
        in_specs=in_specs,
        out_specs=out_specs,
        out_shape=out_shape,
        scratch_shapes=[pltpu.VMEM((BTp, Cp), jnp.float32),   # resident z
                        pltpu.VMEM((Bp, 1), jnp.float32)],    # resident logdet
        compiler_params=pltpu.CompilerParams(
            dimension_semantics=("arbitrary",)),
    )(seg, mask, z_p, c_p,
      packed["bias"], packed["esc"], packed["wt"],
      packed["w1a"], packed["w1b"], packed["b1"],
      packed["w2"], packed["b2"],
      packed["w3s"], packed["b3s"], packed["w3c"], packed["b3c"])

    z_out = zo[:BT, :C].reshape(B, T, C).transpose(0, 2, 1)
    ld_out = ldo[:B, 0] + const + logdet
    return z_out, ld_out


# --------------------------- parameter construction ---------------------------
def init_flownet_params(key, x_channels, hidden_channels, cond_channels, K):
    """Deterministic synthetic params matching the module's parameter shapes.
    (LinearZeroInit starts at zero in the module; we perturb it slightly so the
    affine shift/scale path is numerically exercised by the test.)"""
    C, H, N = x_channels, hidden_channels, cond_channels
    C1, C2 = C // 2, C - C // 2
    Cin, Cout = C1 + N, 2 * C2
    params = []
    for _ in range(K):
        key, k0, k1, k2, k3, k4, k5, k6, k7, k8 = jax.random.split(key, 10)
        q = jnp.linalg.qr(jax.random.normal(k2, (C, C), jnp.float32))[0]
        params.append(dict(
            bias=0.1 * jax.random.normal(k0, (C,), jnp.float32),
            logs=0.1 * jax.random.normal(k1, (C,), jnp.float32),
            w=1.05 * q,                                   # invconv weight (nonzero log|det|)
            w1=jax.random.normal(k3, (Cin, H), jnp.float32) / (Cin ** 0.5),
            b1=0.01 * jax.random.normal(k4, (H,), jnp.float32),
            w2=jax.random.normal(k5, (H, H), jnp.float32) / (H ** 0.5),
            b2=0.01 * jax.random.normal(k6, (H,), jnp.float32),
            w3=0.1 * jax.random.normal(k7, (H, Cout), jnp.float32),
            b3=0.01 * jax.random.normal(k8, (Cout,), jnp.float32)))
    return params


# ----------------------------- pure-JAX reference -----------------------------
def _flownet_ref(z, cond, params_list, logdet=0.0):
    B, C, T = z.shape
    C1 = C // 2
    ld = jnp.full((B,), logdet, jnp.float32)
    for p in params_list:
        z = (z + p["bias"][None, :, None]) * jnp.exp(p["logs"])[None, :, None]
        ld = ld + T * jnp.sum(p["logs"])
        z = jnp.einsum("oc,bct->bot", p["w"], z)
        ld = ld + T * jnp.linalg.slogdet(p["w"])[1]
        z1, z2 = z[:, :C1], z[:, C1:]
        x = jnp.concatenate([z1, cond], axis=1).transpose(0, 2, 1)
        h = jax.nn.relu(x @ p["w1"] + p["b1"])
        h = jax.nn.relu(h @ p["w2"] + p["b2"])
        h = (h @ p["w3"] + p["b3"]).transpose(0, 2, 1)
        shift, scale = h[:, 0::2], h[:, 1::2]
        scale = jax.nn.sigmoid(scale + 2.0) + 1e-6
        z2 = (z2 + shift) * scale
        ld = ld + jnp.sum(jnp.log(scale), axis=(1, 2))
        z = jnp.concatenate([z1, z2], axis=1)
    return z, ld


# ------------------------------------ main ------------------------------------
if __name__ == "__main__":
    B, C, T = 2, 6, 16            # batch, x_channels, sequence length
    H, N, K = 32, 4, 3            # hidden_channels, cond_channels, K flow steps

    key = jax.random.PRNGKey(0)
    kz, kc, kp = jax.random.split(key, 3)
    z = jax.random.normal(kz, (B, C, T), jnp.float32)      # PyTorch NCW layout
    cond = jax.random.normal(kc, (B, N, T), jnp.float32)
    params = init_flownet_params(kp, C, H, N, K)

    fwd = jax.jit(flownet_forward)
    z_out, ld_out = fwd(z, cond, params, 0.0)
    z_out = jax.block_until_ready(z_out)
    ld_out = jax.block_until_ready(ld_out)

    z_ref, ld_ref = _flownet_ref(z, cond, params, 0.0)
    assert z_out.shape == (B, C, T) and ld_out.shape == (B,)
    assert jnp.allclose(z_out, z_ref, rtol=1e-3, atol=1e-3), \
        float(jnp.max(jnp.abs(z_out - z_ref)))
    assert jnp.allclose(ld_out, ld_ref, rtol=1e-3, atol=1e-3), \
        float(jnp.max(jnp.abs(ld_out - ld_ref)))

    print("KERNEL_OK")
</pallas_src>

<mosaic_0001>
module attributes {stable_mosaic.version = 11 : i64} {
  func.func @_flownet_fused_kernel(%arg0: i32, %arg1: memref<8x32xf32, #tpu.memory_space<vmem>>, %arg2: memref<1x128xf32, #tpu.memory_space<vmem>>, %arg3: memref<32x128xf32, #tpu.memory_space<vmem>>, %arg4: memref<32x128xf32, #tpu.memory_space<vmem>>, %arg5: memref<1x1x128xf32, #tpu.memory_space<vmem>>, %arg6: memref<1x1x128xf32, #tpu.memory_space<vmem>>, %arg7: memref<1x128x128xf32, #tpu.memory_space<vmem>>, %arg8: memref<1x128x128xf32, #tpu.memory_space<vmem>>, %arg9: memref<1x128x128xf32, #tpu.memory_space<vmem>>, %arg10: memref<1x1x128xf32, #tpu.memory_space<vmem>>, %arg11: memref<1x128x128xf32, #tpu.memory_space<vmem>>, %arg12: memref<1x1x128xf32, #tpu.memory_space<vmem>>, %arg13: memref<1x128x128xf32, #tpu.memory_space<vmem>>, %arg14: memref<1x1x128xf32, #tpu.memory_space<vmem>>, %arg15: memref<1x128x128xf32, #tpu.memory_space<vmem>>, %arg16: memref<1x1x128xf32, #tpu.memory_space<vmem>>, %arg17: memref<32x128xf32, #tpu.memory_space<vmem>>, %arg18: memref<8x1xf32, #tpu.memory_space<vmem>>, %arg19: memref<32x128xf32, #tpu.memory_space<vmem>>, %arg20: memref<8x1xf32, #tpu.memory_space<vmem>>) attributes {dimension_semantics = [#tpu.dimension_semantics<arbitrary>], iteration_bounds = array<i64: 3>, scalar_prefetch = 0 : i64, scratch_operands = 2 : i64, tpu.core_type = #tpu.core_type<tc>, window_params = [{pipeline_mode = #tpu.pipeline_mode<synchronous>, transform_indices = @transform_0, window_bounds = array<i64: 8, 32>}, {pipeline_mode = #tpu.pipeline_mode<synchronous>, transform_indices = @transform_1, window_bounds = array<i64: 1, 128>}, {pipeline_mode = #tpu.pipeline_mode<synchronous>, transform_indices = @transform_2, window_bounds = array<i64: 32, 128>}, {pipeline_mode = #tpu.pipeline_mode<synchronous>, transform_indices = @transform_3, window_bounds = array<i64: 32, 128>}, {transform_indices = @transform_4, window_bounds = array<i64: 1, 1, 128>}, {transform_indices = @transform_5, window_bounds = array<i64: 1, 1, 128>}, {transform_indices = @transform_6, window_bounds = array<i64: 1, 128, 128>}, {transform_indices = @transform_7, window_bounds = array<i64: 1, 128, 128>}, {transform_indices = @transform_8, window_bounds = array<i64: 1, 128, 128>}, {transform_indices = @transform_9, window_bounds = array<i64: 1, 1, 128>}, {transform_indices = @transform_10, window_bounds = array<i64: 1, 128, 128>}, {transform_indices = @transform_11, window_bounds = array<i64: 1, 1, 128>}, {transform_indices = @transform_12, window_bounds = array<i64: 1, 128, 128>}, {transform_indices = @transform_13, window_bounds = array<i64: 1, 1, 128>}, {transform_indices = @transform_14, window_bounds = array<i64: 1, 128, 128>}, {transform_indices = @transform_15, window_bounds = array<i64: 1, 1, 128>}, {pipeline_mode = #tpu.pipeline_mode<synchronous>, transform_indices = @transform_16, window_bounds = array<i64: 32, 128>}, {pipeline_mode = #tpu.pipeline_mode<synchronous>, transform_indices = @transform_17, window_bounds = array<i64: 8, 1>}]} {
    %c0_i32 = arith.constant 0 : i32
    %0 = arith.cmpi eq, %arg0, %c0_i32 : i32
    %1 = arith.extui %0 : i1 to i32
    %c0_i32_0 = arith.constant 0 : i32
    %2 = arith.cmpi ne, %1, %c0_i32_0 : i32
    scf.if %2 {
      %c0_65 = arith.constant 0 : index
      %c0_66 = arith.constant 0 : index
      %82 = vector.load %arg3[%c0_65, %c0_66] : memref<32x128xf32, #tpu.memory_space<vmem>>, vector<32x128xf32>
      %c0_67 = arith.constant 0 : index
      %c0_68 = arith.constant 0 : index
      %83 = vector.load %arg19[%c0_67, %c0_68] : memref<32x128xf32, #tpu.memory_space<vmem>>, vector<32x128xf32>
      tpu.vector_store %arg19[%c0_67, %c0_68], %82 {strides = array<i32>} : memref<32x128xf32, #tpu.memory_space<vmem>>, vector<32x128xf32>,
      %cst_69 = arith.constant 0.000000e+00 : f32
      %84 = vector.broadcast %cst_69 : f32 to vector<8x1xf32>
      %c0_70 = arith.constant 0 : index
      %c0_71 = arith.constant 0 : index
      %85 = vector.load %arg20[%c0_70, %c0_71] : memref<8x1xf32, #tpu.memory_space<vmem>>, vector<8x1xf32>
      tpu.vector_store %arg20[%c0_70, %c0_71], %84 {strides = array<i32>} : memref<8x1xf32, #tpu.memory_space<vmem>>, vector<8x1xf32>,
    } else {
    }
    %c0 = arith.constant 0 : index
    %c0_1 = arith.constant 0 : index
    %3 = vector.load %arg19[%c0, %c0_1] : memref<32x128xf32, #tpu.memory_space<vmem>>, vector<32x128xf32>
    %c0_2 = arith.constant 0 : index
    %c0_3 = arith.constant 0 : index
    %c0_4 = arith.constant 0 : index
    %4 = vector.load %arg5[%c0_2, %c0_3, %c0_4] : memref<1x1x128xf32, #tpu.memory_space<vmem>>, vector<1x1x128xf32>
    %5 = vector.shape_cast %4 : vector<1x1x128xf32> to vector<1x128xf32>
    %6 = vector.broadcast %5 : vector<1x128xf32> to vector<32x128xf32>
    %7 = arith.addf %3, %6 : vector<32x128xf32>
    %c0_5 = arith.constant 0 : index
    %c0_6 = arith.constant 0 : index
    %c0_7 = arith.constant 0 : index
    %8 = vector.load %arg6[%c0_5, %c0_6, %c0_7] : memref<1x1x128xf32, #tpu.memory_space<vmem>>, vector<1x1x128xf32>
    %9 = vector.shape_cast %8 : vector<1x1x128xf32> to vector<1x128xf32>
    %10 = vector.broadcast %9 : vector<1x128xf32> to vector<32x128xf32>
    %11 = arith.mulf %7, %10 : vector<32x128xf32>
    %c0_8 = arith.constant 0 : index
    %c0_9 = arith.constant 0 : index
    %c0_10 = arith.constant 0 : index
    %12 = vector.load %arg7[%c0_8, %c0_9, %c0_10] : memref<1x128x128xf32, #tpu.memory_space<vmem>>, vector<1x128x128xf32>
    %13 = vector.shape_cast %12 : vector<1x128x128xf32> to vector<128x128xf32>
    %cst = arith.constant dense<0.000000e+00> : vector<32x128xf32>
    %14 = tpu.matmul %11, %13, %cst {dimension_numbers = #tpu.dot_dimension_numbers<[1], [0], [0], [1], [0, 0, 1, 1], [], []>} : vector<32x128xf32>, vector<128x128xf32>, vector<32x128xf32> -> vector<32x128xf32>
    %c0_11 = arith.constant 0 : index
    %c0_12 = arith.constant 0 : index
    %15 = vector.load %arg4[%c0_11, %c0_12] : memref<32x128xf32, #tpu.memory_space<vmem>>, vector<32x128xf32>
    %c0_13 = arith.constant 0 : index
    %c0_14 = arith.constant 0 : index
    %c0_15 = arith.constant 0 : index
    %16 = vector.load %arg8[%c0_13, %c0_14, %c0_15] : memref<1x128x128xf32, #tpu.memory_space<vmem>>, vector<1x128x128xf32>
    %17 = vector.shape_cast %16 : vector<1x128x128xf32> to vector<128x128xf32>
    %cst_16 = arith.constant dense<0.000000e+00> : vector<32x128xf32>
    %18 = tpu.matmul %14, %17, %cst_16 {dimension_numbers = #tpu.dot_dimension_numbers<[1], [0], [0], [1], [0, 0, 1, 1], [], []>} : vector<32x128xf32>, vector<128x128xf32>, vector<32x128xf32> -> vector<32x128xf32>
    %c0_17 = arith.constant 0 : index
    %c0_18 = arith.constant 0 : index
    %c0_19 = arith.constant 0 : index
    %19 = vector.load %arg9[%c0_17, %c0_18, %c0_19] : memref<1x128x128xf32, #tpu.memory_space<vmem>>, vector<1x128x128xf32>
    %20 = vector.shape_cast %19 : vector<1x128x128xf32> to vector<128x128xf32>
    %cst_20 = arith.constant dense<0.000000e+00> : vector<32x128xf32>
    %21 = tpu.matmul %15, %20, %cst_20 {dimension_numbers = #tpu.dot_dimension_numbers<[1], [0], [0], [1], [0, 0, 1, 1], [], []>} : vector<32x128xf32>, vector<128x128xf32>, vector<32x128xf32> -> vector<32x128xf32>
    %22 = arith.addf %18, %21 : vector<32x128xf32>
    %c0_21 = arith.constant 0 : index
    %c0_22 = arith.constant 0 : index
    %c0_23 = arith.constant 0 : index
    %23 = vector.load %arg10[%c0_21, %c0_22, %c0_23] : memref<1x1x128xf32, #tpu.memory_space<vmem>>, vector<1x1x128xf32>
    %24 = vector.shape_cast %23 : vector<1x1x128xf32> to vector<1x128xf32>
    %25 = vector.broadcast %24 : vector<1x128xf32> to vector<32x128xf32>
    %26 = arith.addf %22, %25 : vector<32x128xf32>
    %cst_24 = arith.constant 0.000000e+00 : f32
    %27 = vector.broadcast %cst_24 : f32 to vector<32x128xf32>
    %28 = arith.maximumf %26, %27 : vector<32x128xf32>
    %c0_25 = arith.constant 0 : index
    %c0_26 = arith.constant 0 : index
    %c0_27 = arith.constant 0 : index
    %29 = vector.load %arg11[%c0_25, %c0_26, %c0_27] : memref<1x128x128xf32, #tpu.memory_space<vmem>>, vector<1x128x128xf32>
    %30 = vector.shape_cast %29 : vector<1x128x128xf32> to vector<128x128xf32>
    %cst_28 = arith.constant dense<0.000000e+00> : vector<32x128xf32>
    %31 = tpu.matmul %28, %30, %cst_28 {dimension_numbers = #tpu.dot_dimension_numbers<[1], [0], [0], [1], [0, 0, 1, 1], [], []>} : vector<32x128xf32>, vector<128x128xf32>, vector<32x128xf32> -> vector<32x128xf32>
    %c0_29 = arith.constant 0 : index
    %c0_30 = arith.constant 0 : index
    %c0_31 = arith.constant 0 : index
    %32 = vector.load %arg12[%c0_29, %c0_30, %c0_31] : memref<1x1x128xf32, #tpu.memory_space<vmem>>, vector<1x1x128xf32>
    %33 = vector.shape_cast %32 : vector<1x1x128xf32> to vector<1x128xf32>
    %34 = vector.broadcast %33 : vector<1x128xf32> to vector<32x128xf32>
    %35 = arith.addf %31, %34 : vector<32x128xf32>
    %cst_32 = arith.constant 0.000000e+00 : f32
    %36 = vector.broadcast %cst_32 : f32 to vector<32x128xf32>
    %37 = arith.maximumf %35, %36 : vector<32x128xf32>
    %c0_33 = arith.constant 0 : index
    %c0_34 = arith.constant 0 : index
    %c0_35 = arith.constant 0 : index
    %38 = vector.load %arg13[%c0_33, %c0_34, %c0_35] : memref<1x128x128xf32, #tpu.memory_space<vmem>>, vector<1x128x128xf32>
    %39 = vector.shape_cast %38 : vector<1x128x128xf32> to vector<128x128xf32>
    %cst_36 = arith.constant dense<0.000000e+00> : vector<32x128xf32>
    %40 = tpu.matmul %37, %39, %cst_36 {dimension_numbers = #tpu.dot_dimension_numbers<[1], [0], [0], [1], [0, 0, 1, 1], [], []>} : vector<32x128xf32>, vector<128x128xf32>, vector<32x128xf32> -> vector<32x128xf32>
    %c0_37 = arith.constant 0 : index
    %c0_38 = arith.constant 0 : index
    %c0_39 = arith.constant 0 : index
    %41 = vector.load %arg14[%c0_37, %c0_38, %c0_39] : memref<1x1x128xf32, #tpu.memory_space<vmem>>, vector<1x1x128xf32>
    %42 = vector.shape_cast %41 : vector<1x1x128xf32> to vector<1x128xf32>
    %43 = vector.broadcast %42 : vector<1x128xf32> to vector<32x128xf32>
    %44 = arith.addf %40, %43 : vector<32x128xf32>
    %c0_40 = arith.constant 0 : index
    %c0_41 = arith.constant 0 : index
    %c0_42 = arith.constant 0 : index
    %45 = vector.load %arg15[%c0_40, %c0_41, %c0_42] : memref<1x128x128xf32, #tpu.memory_space<vmem>>, vector<1x128x128xf32>
    %46 = vector.shape_cast %45 : vector<1x128x128xf32> to vector<128x128xf32>
    %cst_43 = arith.constant dense<0.000000e+00> : vector<32x128xf32>
    %47 = tpu.matmul %37, %46, %cst_43 {dimension_numbers = #tpu.dot_dimension_numbers<[1], [0], [0], [1], [0, 0, 1, 1], [], []>} : vector<32x128xf32>, vector<128x128xf32>, vector<32x128xf32> -> vector<32x128xf32>
    %c0_44 = arith.constant 0 : index
    %c0_45 = arith.constant 0 : index
    %c0_46 = arith.constant 0 : index
    %48 = vector.load %arg16[%c0_44, %c0_45, %c0_46] : memref<1x1x128xf32, #tpu.memory_space<vmem>>, vector<1x1x128xf32>
    %49 = vector.shape_cast %48 : vector<1x1x128xf32> to vector<1x128xf32>
    %50 = vector.broadcast %49 : vector<1x128xf32> to vector<32x128xf32>
    %51 = arith.addf %47, %50 : vector<32x128xf32>
    %cst_47 = arith.constant 2.000000e+00 : f32
    %52 = vector.broadcast %cst_47 : f32 to vector<32x128xf32>
    %53 = arith.addf %51, %52 : vector<32x128xf32>
    %54 = arith.negf %53 : vector<32x128xf32>
    %55 = math.exp %54 : vector<32x128xf32>
    %cst_48 = arith.constant 1.000000e+00 : f32
    %56 = vector.broadcast %cst_48 : f32 to vector<32x128xf32>
    %57 = arith.addf %56, %55 : vector<32x128xf32>
    %58 = arith.divf %56, %57 : vector<32x128xf32>
    %cst_49 = arith.constant 9.99999997E-7 : f32
    %59 = vector.broadcast %cst_49 : f32 to vector<32x128xf32>
    %60 = arith.addf %58, %59 : vector<32x128xf32>
    %c0_50 = arith.constant 0 : index
    %c0_51 = arith.constant 0 : index
    %61 = vector.load %arg2[%c0_50, %c0_51] : memref<1x128xf32, #tpu.memory_space<vmem>>, vector<1x128xf32>
    %cst_52 = arith.constant 1.000000e+00 : f32
    %62 = vector.broadcast %cst_52 : f32 to vector<32x128xf32>
    %63 = arith.subf %60, %62 : vector<32x128xf32>
    %64 = vector.broadcast %61 : vector<1x128xf32> to vector<32x128xf32>
    %65 = arith.mulf %64, %63 : vector<32x128xf32>
    %cst_53 = arith.constant 1.000000e+00 : f32
    %66 = vector.broadcast %cst_53 : f32 to vector<32x128xf32>
    %67 = arith.addf %66, %65 : vector<32x128xf32>
    %68 = arith.addf %14, %44 : vector<32x128xf32>
    %69 = arith.mulf %68, %67 : vector<32x128xf32>
    %c0_54 = arith.constant 0 : index
    %c0_55 = arith.constant 0 : index
    %70 = vector.load %arg1[%c0_54, %c0_55] : memref<8x32xf32, #tpu.memory_space<vmem>>, vector<8x32xf32>
    %71 = math.log %67 : vector<32x128xf32>
    %cst_56 = arith.constant dense<0.000000e+00> : vector<8x128xf32>
    %72 = tpu.matmul %70, %71, %cst_56 {dimension_numbers = #tpu.dot_dimension_numbers<[1], [0], [0], [1], [0, 0, 1, 1], [], []>} : vector<8x32xf32>, vector<32x128xf32>, vector<8x128xf32> -> vector<8x128xf32>
    %c0_57 = arith.constant 0 : index
    %c0_58 = arith.constant 0 : index
    %73 = vector.load %arg20[%c0_57, %c0_58] : memref<8x1xf32, #tpu.memory_space<vmem>>, vector<8x1xf32>
    %cst_59 = arith.constant dense<0.000000e+00> : vector<8xf32>
    %74 = vector.multi_reduction <add>, %72, %cst_59 [1] : vector<8x128xf32> to vector<8xf32>
    %75 = vector.shape_cast %74 : vector<8xf32> to vector<8x1xf32>
    %76 = arith.addf %73, %75 : vector<8x1xf32>
    %c0_60 = arith.constant 0 : index
    %c0_61 = arith.constant 0 : index
    %77 = vector.load %arg19[%c0_60, %c0_61] : memref<32x128xf32, #tpu.memory_space<vmem>>, vector<32x128xf32>
    tpu.vector_store %arg19[%c0_60, %c0_61], %69 {strides = array<i32>} : memref<32x128xf32, #tpu.memory_space<vmem>>, vector<32x128xf32>,
    %c0_62 = arith.constant 0 : index
    %c0_63 = arith.constant 0 : index
    %78 = vector.load %arg20[%c0_62, %c0_63] : memref<8x1xf32, #tpu.memory_space<vmem>>, vector<8x1xf32>
    tpu.vector_store %arg20[%c0_62, %c0_63], %76 {strides = array<i32>} : memref<8x1xf32, #tpu.memory_space<vmem>>, vector<8x1xf32>,
    %c2_i32 = arith.constant 2 : i32
    %79 = arith.cmpi eq, %arg0, %c2_i32 : i32
    %80 = arith.extui %79 : i1 to i32
    %c0_i32_64 = arith.constant 0 : i32
    %81 = arith.cmpi ne, %80, %c0_i32_64 : i32
    scf.if %81 {
      %c0_65 = arith.constant 0 : index
      %c0_66 = arith.constant 0 : index
      %82 = vector.load %arg17[%c0_65, %c0_66] : memref<32x128xf32, #tpu.memory_space<vmem>>, vector<32x128xf32>
      tpu.vector_store %arg17[%c0_65, %c0_66], %69 {strides = array<i32>} : memref<32x128xf32, #tpu.memory_space<vmem>>, vector<32x128xf32>,
      %c0_67 = arith.constant 0 : index
      %c0_68 = arith.constant 0 : index
      %83 = vector.load %arg18[%c0_67, %c0_68] : memref<8x1xf32, #tpu.memory_space<vmem>>, vector<8x1xf32>
      tpu.vector_store %arg18[%c0_67, %c0_68], %76 {strides = array<i32>} : memref<8x1xf32, #tpu.memory_space<vmem>>, vector<8x1xf32>,
    } else {
    }
    return
  }
  func.func @transform_0(%arg0: i32) -> (i32, i32) {
    %c0_i32 = arith.constant 0 : i32
    %c0_i32_0 = arith.constant 0 : i32
    %c0_i32_1 = arith.constant 0 : i32
    return %c0_i32, %c0_i32_0 : i32, i32
  }
  func.func @transform_1(%arg0: i32) -> (i32, i32) {
    %c0_i32 = arith.constant 0 : i32
    %c0_i32_0 = arith.constant 0 : i32
    %c0_i32_1 = arith.constant 0 : i32
    return %c0_i32, %c0_i32_0 : i32, i32
  }
  func.func @transform_2(%arg0: i32) -> (i32, i32) {
    %c0_i32 = arith.constant 0 : i32
    %c0_i32_0 = arith.constant 0 : i32
    %c0_i32_1 = arith.constant 0 : i32
    return %c0_i32, %c0_i32_0 : i32, i32
  }
  func.func @transform_3(%arg0: i32) -> (i32, i32) {
    %c0_i32 = arith.constant 0 : i32
    %c0_i32_0 = arith.constant 0 : i32
    %c0_i32_1 = arith.constant 0 : i32
    return %c0_i32, %c0_i32_0 : i32, i32
  }
  func.func @transform_4(%arg0: i32) -> (i32, i32, i32) {
    %c0_i32 = arith.constant 0 : i32
    %c0_i32_0 = arith.constant 0 : i32
    %c0_i32_1 = arith.constant 0 : i32
    return %arg0, %c0_i32, %c0_i32_0 : i32, i32, i32
  }
  func.func @transform_5(%arg0: i32) -> (i32, i32, i32) {
    %c0_i32 = arith.constant 0 : i32
    %c0_i32_0 = arith.constant 0 : i32
    %c0_i32_1 = arith.constant 0 : i32
    return %arg0, %c0_i32, %c0_i32_0 : i32, i32, i32
  }
  func.func @transform_6(%arg0: i32) -> (i32, i32, i32) {
    %c0_i32 = arith.constant 0 : i32
    %c0_i32_0 = arith.constant 0 : i32
    %c0_i32_1 = arith.constant 0 : i32
    return %arg0, %c0_i32, %c0_i32_0 : i32, i32, i32
  }
  func.func @transform_7(%arg0: i32) -> (i32, i32, i32) {
    %c0_i32 = arith.constant 0 : i32
    %c0_i32_0 = arith.constant 0 : i32
    %c0_i32_1 = arith.constant 0 : i32
    return %arg0, %c0_i32, %c0_i32_0 : i32, i32, i32
  }
  func.func @transform_8(%arg0: i32) -> (i32, i32, i32) {
    %c0_i32 = arith.constant 0 : i32
    %c0_i32_0 = arith.constant 0 : i32
    %c0_i32_1 = arith.constant 0 : i32
    return %arg0, %c0_i32, %c0_i32_0 : i32, i32, i32
  }
  func.func @transform_9(%arg0: i32) -> (i32, i32, i32) {
    %c0_i32 = arith.constant 0 : i32
    %c0_i32_0 = arith.constant 0 : i32
    %c0_i32_1 = arith.constant 0 : i32
    return %arg0, %c0_i32, %c0_i32_0 : i32, i32, i32
  }
  func.func @transform_10(%arg0: i32) -> (i32, i32, i32) {
    %c0_i32 = arith.constant 0 : i32
    %c0_i32_0 = arith.constant 0 : i32
    %c0_i32_1 = arith.constant 0 : i32
    return %arg0, %c0_i32, %c0_i32_0 : i32, i32, i32
  }
  func.func @transform_11(%arg0: i32) -> (i32, i32, i32) {
    %c0_i32 = arith.constant 0 : i32
    %c0_i32_0 = arith.constant 0 : i32
    %c0_i32_1 = arith.constant 0 : i32
    return %arg0, %c0_i32, %c0_i32_0 : i32, i32, i32
  }
  func.func @transform_12(%arg0: i32) -> (i32, i32, i32) {
    %c0_i32 = arith.constant 0 : i32
    %c0_i32_0 = arith.constant 0 : i32
    %c0_i32_1 = arith.constant 0 : i32
    return %arg0, %c0_i32, %c0_i32_0 : i32, i32, i32
  }
  func.func @transform_13(%arg0: i32) -> (i32, i32, i32) {
    %c0_i32 = arith.constant 0 : i32
    %c0_i32_0 = arith.constant 0 : i32
    %c0_i32_1 = arith.constant 0 : i32
    return %arg0, %c0_i32, %c0_i32_0 : i32, i32, i32
  }
  func.func @transform_14(%arg0: i32) -> (i32, i32, i32) {
    %c0_i32 = arith.constant 0 : i32
    %c0_i32_0 = arith.constant 0 : i32
    %c0_i32_1 = arith.constant 0 : i32
    return %arg0, %c0_i32, %c0_i32_0 : i32, i32, i32
  }
  func.func @transform_15(%arg0: i32) -> (i32, i32, i32) {
    %c0_i32 = arith.constant 0 : i32
    %c0_i32_0 = arith.constant 0 : i32
    %c0_i32_1 = arith.constant 0 : i32
    return %arg0, %c0_i32, %c0_i32_0 : i32, i32, i32
  }
  func.func @transform_16(%arg0: i32) -> (i32, i32) {
    %c0_i32 = arith.constant 0 : i32
    %c0_i32_0 = arith.constant 0 : i32
    %c0_i32_1 = arith.constant 0 : i32
    return %c0_i32, %c0_i32_0 : i32, i32
  }
  func.func @transform_17(%arg0: i32) -> (i32, i32) {
    %c0_i32 = arith.constant 0 : i32
    %c0_i32_0 = arith.constant 0 : i32
    %c0_i32_1 = arith.constant 0 : i32
    return %c0_i32, %c0_i32_0 : i32, i32
  }
}

</mosaic_0001>

<llo_original>
// kernel: custom-call.12
$region0: #{custom-call.12}
  %s0 = inlined_call_operand.vmem [shape: f32[6,6], index: 0, kind: input, shape index: {}]
  %s1 = inlined_call_operand.vmem [shape: f32[6,6], index: 1, kind: output, shape index: {0}]
  %s2 = inlined_call_operand.hbm [shape: s32[6], index: 2, kind: output, shape index: {1}]
  %s3 = inlined_call_operand.hbm [shape: s32[6], index: 3, kind: output, shape index: {2}]
  %4 = xla_tuple %s1, %s2, %s3
  $region1: #{custom-call.12} parent=0
    #allocation0 [shape = 'u8[4096]{0}', space=vmem, size = 0x1000, scoped, tag = 'operand span for operand 0']
    #allocation1 [shape = 'u8[4096]{0}', space=vmem, size = 0x1000, scoped, tag = 'operand span for operand 1']
    #allocation2 [shape = 'u8[4096]{0}', space=vmem, size = 0x1000, scoped, tag = 'operand span for operand 2']
    #allocation3 [shape = 'u8[512]{0}', space=vmem, size = 0x400, scoped, tag = 'packed  for operand 2']
    #allocation4 [shape = 's32[1]{0}', space=sflag, size = 0x4, scoped, tag = 'scoped memory for custom-call.12']
    #allocation5 [shape = 'u8[4096]{0}', space=vmem, size = 0x1000, scoped, tag = 'operand span for operand 3']
    #allocation6 [shape = 'u8[512]{0}', space=vmem, size = 0x400, scoped, tag = 'packed  for operand 3']
    #allocation7 [shape = 's32[1]{0}', space=sflag, size = 0x4, scoped, tag = 'scoped memory for custom-call.12']
    #allocation8 [shape = 's32[6,128]{1,0}', space=vmem, size = 0x1000, scoped, tag = 'scratch for permutations']
    %5 = vsyncpa [#allocation4], 0
    %6 = vsyncpa [#allocation7], 0
    %p8 = scmp.gt.s32.totalorder 8, 0
    // Predicated region
    $region2: #{custom-call.12} parent=1 // pred_check
      %p9 = pneg %p8
    $region3: #{custom-call.12} parent=1 // pred_check_branch
      %11 = sbr.rel (%p9) target = $region5
    $region4: #{custom-call.12} parent=1 // pred_region
      %s12 = sshra.s32 8, 3
      %p13 = scmp.gt.s32.totalorder %s12, 0
      // Predicated region
      $region6: #{custom-call.12} parent=4 // pred_check
        %p14 = pneg %p13
      $region7: #{custom-call.12} parent=4 // pred_check_branch
        %16 = sbr.rel (%p14) target = $region9
      $region8: #{custom-call.12} parent=4 // pred_region
        %s17 = ssub.s32 %s12, 1
        %s18 = smul.u32 %s17, 128
        %s19 = sshra.s32 %s18, 4
        %s20 = scalar_lea.vmem %s0, %s19
        %v21 = vld [vmem:[%s0] sm:$0xff]
        // While loop
        $region10: #{custom-call.12} parent=8 // loop_pre_header
          _
        $region11: #{custom-call.12} parent=8 // loop_header
          %s22 = sphi %s0, %s44
          %s23 = sphi [#allocation0], %s45
          %v24 = vphi %v21, %v46
          %s25 = ssub.s32 %s20, 64
          %p26 = scmp.gt.s32.totalorder %s22, %s25
        $region12: #{custom-call.12} parent=8 // loop_header_branch
          %28 = sbr.rel (%p26) target = $region16
        $region13: #{custom-call.12} parent=8 // loop_body
          %29 = vst [vmem:[%s23] sm:$0xff] %v24
          %v30 = vld [vmem:[%s22 + $0x8] sm:$0xff]
          %31 = vst [vmem:[%s23 + $0x8] sm:$0xff] %v30
          %v32 = vld [vmem:[%s22 + $0x10] sm:$0xff]
          %33 = vst [vmem:[%s23 + $0x10] sm:$0xff] %v32
          %v34 = vld [vmem:[%s22 + $0x18] sm:$0xff]
          %35 = vst [vmem:[%s23 + $0x18] sm:$0xff] %v34
          %v36 = vld [vmem:[%s22 + $0x20] sm:$0xff]
          %37 = vst [vmem:[%s23 + $0x20] sm:$0xff] %v36
          %v38 = vld [vmem:[%s22 + $0x28] sm:$0xff]
          %39 = vst [vmem:[%s23 + $0x28] sm:$0xff] %v38
          %v40 = vld [vmem:[%s22 + $0x30] sm:$0xff]
          %41 = vst [vmem:[%s23 + $0x30] sm:$0xff] %v40
          %v42 = vld [vmem:[%s22 + $0x38] sm:$0xff]
          %43 = vst [vmem:[%s23 + $0x38] sm:$0xff] %v42
        $region14: #{custom-call.12} parent=8 // loop_footer
          %s44 = scalar_lea.vmem %s22, 64
          %s45 = scalar_lea.vmem %s23, 64
          %v46 = vld [vmem:[%s22 + $0x40] sm:$0xff]
        $region15: #{custom-call.12} parent=8 // loop_footer_branch
          %47 = sbr.rel target = $region11
        $region16: #{custom-call.12} parent=8 // loop_exit
          _
        // While loop
        $region17: #{custom-call.12} parent=8 // loop_pre_header
          _
        $region18: #{custom-call.12} parent=8 // loop_header
          %s48 = sphi %s22, %s56
          %s49 = sphi %s23, %s57
          %v50 = vphi %v24, %v50
          %p51 = scmp.gt.s32.totalorder %s48, %s20
        $region19: #{custom-call.12} parent=8 // loop_header_branch
          %53 = sbr.rel (%p51) target = $region23
        $region20: #{custom-call.12} parent=8 // loop_body
          %v54 = vld [vmem:[%s48] sm:$0xff]
          %55 = vst [vmem:[%s49] sm:$0xff] %v54
        $region21: #{custom-call.12} parent=8 // loop_footer
          %s56 = scalar_lea.vmem %s48, 8
          %s57 = scalar_lea.vmem %s49, 8
        $region22: #{custom-call.12} parent=8 // loop_footer_branch
          %58 = sbr.rel target = $region18
        $region23: #{custom-call.12} parent=8 // loop_exit
          _
      $region9: #{custom-call.12} parent=4 // pred_fallthru
        _
      %s59 = sand.u32 8, 7
      %s60 = sshllo.u32 0, %s59
      %s61 = smul.u32 %s12, 128
      %s62 = sshra.s32 %s61, 4
      %s63 = scalar_lea.vmem [#allocation0], %s62
      %s64 = smul.u32 %s12, 128
      %s65 = sshra.s32 %s64, 4
      %s66 = scalar_lea.vmem %s0, %s65
      %v67 = vld [vmem:[%s66] sm:%s60]
      %68 = vst [vmem:[%s63] sm:%s60] %v67
    $region5: #{custom-call.12} parent=1 // pred_fallthru
      _
    %v69 = vld [vmem:[#allocation0] sm:$0xff]
    %70 = vst [vmem:[#allocation1] sm:$0xff] %v69
    %71 = vst [vmem:[#allocation2] sm:$0x1] 0
    %v72 = vlaneseq
    %v73 = vshrl.u32 %v72, 7
    %v74 = vmov %v73
    %76 = vst [vmem:[#allocation8] sm:$0xff] %v74
    loop: start=0, step=1, limit=6
    $region25: #{custom-call.12} parent=1 // loop_pre_header
      _
    $region26: #{custom-call.12} parent=1 // loop_header
      %s78 = sphi 0, %s82
      %p79 = scmp.ge.s32.totalorder %s78, 6
    $region27: #{custom-call.12} parent=1 // loop_header_branch
      %81 = sbr.rel (%p79) target = $region31
    $region28: #{custom-call.12} parent=1 // loop_body
      %v83 = vstv %s78
      %v84 = vlaneseq
      %v85 = vshrl.u32 %v84, 7
      %v86 = vmov %v85
      %v87 = vld [vmem:[#allocation1] sm:$0xff]
      %v88 = vand.u32 2147483647, %v87
      %v90 = vstv %s78
      %vm91 = vcmp.ge.s32.totalorder %v86, %v90
      %vm92 = vcmp.lt.s32.totalorder %v86, 6
      %vm93 = vmand %vm91, %vm92
      %vm94 = vcmp.lt.f32.partialorder -inf, %v88
      %vm95 = vmand %vm93, %vm94
      %v96 = vsel %vm95, %v86, %v83
      %v97 = vsel %vm95, %v88, -inf
      %v98 = vrot.slane %v97, 1
      %v99 = vrot.slane %v96, 1
      %vm100 = vcmp.ge.f32.partialorder %v98, %v97
      %v101 = vsel %vm100, %v98, %v97
      %v102 = vsel %vm100, %v99, %v96
      %v103 = vrot.slane %v98, 1
      %v104 = vrot.slane %v99, 1
      %vm105 = vcmp.ge.f32.partialorder %v103, %v101
      %v106 = vsel %vm105, %v103, %v101
      %v107 = vsel %vm105, %v104, %v102
      %v108 = vrot.slane %v103, 1
      %v109 = vrot.slane %v104, 1
      %vm110 = vcmp.ge.f32.partialorder %v108, %v106
      %v111 = vsel %vm110, %v108, %v106
      %v112 = vsel %vm110, %v109, %v107
      %v113 = vrot.slane %v108, 1
      %v114 = vrot.slane %v109, 1
      %vm115 = vcmp.ge.f32.partialorder %v113, %v111
      %v116 = vsel %vm115, %v113, %v111
      %v117 = vsel %vm115, %v114, %v112
      %v118 = vrot.slane %v113, 1
      %v119 = vrot.slane %v114, 1
      %vm120 = vcmp.ge.f32.partialorder %v118, %v116
      %v121 = vsel %vm120, %v118, %v116
      %v122 = vsel %vm120, %v119, %v117
      %v123 = vrot.slane %v118, 1
      %v124 = vrot.slane %v119, 1
      %vm125 = vcmp.ge.f32.partialorder %v123, %v121
      %v126 = vsel %vm125, %v123, %v121
      %v127 = vsel %vm125, %v124, %v122
      %v128 = vrot.slane %v123, 1
      %v129 = vrot.slane %v124, 1
      %vm130 = vcmp.ge.f32.partialorder %v128, %v126
      %v131 = vsel %vm130, %v128, %v126
      %v132 = vsel %vm130, %v129, %v127
      %s133 = ssub.s32 128, %s78
      %134 = vrot.lane.b32.xlu0 %v132, %s133
      %v135 = vpop.permute.xlu0 %134
      %s136 = vtos %v135
      %v137 = vstv %s78
      %v138 = vlaneseq
      %v139 = vand.u32 %v138, 127
      %vm140 = vcmp.eq.s32.totalorder %v139, %v137
      %v141 = vstv %s136
      %v142 = vld [vmem:[#allocation2] ss:$0 sm:$0xff]
      %v143 = vsel %vm140, %v141, %v142
      %144 = vst [vmem:[#allocation2] sm:$0x1] %v143
      %s145 = scalar_lea.vmem [#allocation1], %s78
      %s146 = scalar_lea.vmem [#allocation1], %s136
      %v147 = vld [vmem:[%s145] ss:$0 sm:$0xff]
      %v148 = vld [vmem:[%s146] ss:$0 sm:$0xff]
      %149 = vst [vmem:[%s146] sm:$0x1] %v147
      %150 = vst [vmem:[%s145] sm:$0x1] %v148
      %s151 = scalar_lea.vmem [#allocation8], %s78
      %s152 = scalar_lea.vmem [#allocation8], %s136
      %v153 = vld [vmem:[%s151] ss:$0 sm:$0xff]
      %v154 = vld [vmem:[%s152] ss:$0 sm:$0xff]
      %155 = vst [vmem:[%s152] sm:$0x1] %v153
      %156 = vst [vmem:[%s151] sm:$0x1] %v154
      %vm157 = vcmp.ne.f32.partialorder %v148, 0.0
      %vm158 = vmand %vm140, %vm157
      %v159 = vsel %vm158, %v148, 1.0
      %v160 = vlaneseq
      %v161 = vand.u32 %v160, 127
      %v162 = vstv %s78
      %vm163 = vcmp.gt.s32.totalorder %v161, %v162
      %v164 = vsel %vm163, %v148, 0.0
      %v165 = vlaneseq
      %v166 = vshrl.u32 %v165, 7
      %v167 = vmov %v166
      %v168 = vld [vmem:[#allocation1] sm:$0xff]
      %v170 = vstv %s78
      %vm171 = vcmp.gt.s32.totalorder %v167, %v170
      %v172 = vsel %vm171, %v159, 1.0
      %v173 = vrcp.pop %v172
      %v174 = vmul.f32 %v168, %v173
      %vm175 = vmand %vm171, %vm140
      %v176 = vsel %vm175, %v174, 0.0
      %177 = vadd.xlane.f32.xlu0 %v176
      %v178 = vpop.xlane.xlu0 %177
      %v179 = vmul.f32 %v178, %v164
      %v180 = vsub.f32 %v174, %v179
      %181 = vst [vmem:[#allocation1] sm:$0xff] %v180
    $region29: #{custom-call.12} parent=1 // loop_footer
      %s82 = sadd.s32 1, %s78
    $region30: #{custom-call.12} parent=1 // loop_footer_branch
      %77 = sbr.rel target = $region26
    $region31: #{custom-call.12} parent=1 // loop_exit
      _
    %v182 = vld [vmem:[#allocation8] sm:$0xff]
    %s183 = scalar_lea.vmem [#allocation8], 8
    %s184 = scalar_lea.vmem [#allocation8], 16
    %s185 = scalar_lea.vmem [#allocation8], 24
    %s186 = scalar_lea.vmem [#allocation8], 32
    %s187 = scalar_lea.vmem [#allocation8], 40
    %s188 = scalar_lea.vmem [#allocation8], 48
    %s189 = scalar_lea.vmem [#allocation8], 56
    %s190 = scalar_lea.vmem [#allocation8], 64
    %s191 = scalar_lea.vmem [#allocation8], 72
    %s192 = scalar_lea.vmem [#allocation8], 80
    %s193 = scalar_lea.vmem [#allocation8], 88
    %s194 = scalar_lea.vmem [#allocation8], 96
    %s195 = scalar_lea.vmem [#allocation8], 104
    %s196 = scalar_lea.vmem [#allocation8], 112
    %s197 = scalar_lea.vmem [#allocation8], 120
    %198 = vxpose.xlu0.b32.start [1/16] %v182, 128
    %199 = vxpose.xlu0.b32.cont [2/16] 0, 128
    %200 = vxpose.xlu0.b32.cont [3/16] 0, 128
    %201 = vxpose.xlu0.b32.cont [4/16] 0, 128
    %202 = vxpose.xlu0.b32.cont [5/16] 0, 128
    %203 = vxpose.xlu0.b32.cont [6/16] 0, 128
    %204 = vxpose.xlu0.b32.cont [7/16] 0, 128
    %205 = vxpose.xlu0.b32.cont [8/16] 0, 128
    %206 = vxpose.xlu0.b32.cont [9/16] 0, 128
    %207 = vxpose.xlu0.b32.cont [10/16] 0, 128
    %208 = vxpose.xlu0.b32.cont [11/16] 0, 128
    %209 = vxpose.xlu0.b32.cont [12/16] 0, 128
    %210 = vxpose.xlu0.b32.cont [13/16] 0, 128
    %211 = vxpose.xlu0.b32.cont [14/16] 0, 128
    %212 = vxpose.xlu0.b32.cont [15/16] 0, 128
    %213 = vxpose.xlu0.b32.end [16/16] 0, 128
    %v214 = vpop.trf.xlu0
    %v215 = vpop.trf.xlu0
    %v216 = vpop.trf.xlu0
    %v217 = vpop.trf.xlu0
    %v218 = vpop.trf.xlu0
    %v219 = vpop.trf.xlu0
    %v220 = vpop.trf.xlu0
    %v221 = vpop.trf.xlu0
    %v222 = vpop.trf.xlu0
    %v223 = vpop.trf.xlu0
    %v224 = vpop.trf.xlu0
    %v225 = vpop.trf.xlu0
    %v226 = vpop.trf.xlu0
    %v227 = vpop.trf.xlu0
    %v228 = vpop.trf.xlu0
    %v229 = vpop.trf.xlu0
    %230 = vst [vmem:[#allocation5] sm:$0x1] %v214
    %s232 = sshllo.u32 0, 1
    %v234 = vld [vmem:[#allocation2] sm:%s232]
    %s235 = sshllo.u32 0, 1
    %236 = vst [vmem:[#allocation3] sm:%s235] %v234
    %s238 = sshllo.u32 0, 1
    %v240 = vld [vmem:[#allocation5] sm:%s238]
    %s241 = sshllo.u32 0, 1
    %242 = vst [vmem:[#allocation6] sm:%s241] %v240
    %p244 = scmp.gt.s32.totalorder 8, 0
    // Predicated region
    $region32: #{custom-call.12} parent=1 // pred_check
      %p245 = pneg %p244
    $region33: #{custom-call.12} parent=1 // pred_check_branch
      %247 = sbr.rel (%p245) target = $region35
    $region34: #{custom-call.12} parent=1 // pred_region
      %s248 = sshra.s32 8, 3
      %p249 = scmp.gt.s32.totalorder %s248, 0
      // Predicated region
      $region36: #{custom-call.12} parent=34 // pred_check
        %p250 = pneg %p249
      $region37: #{custom-call.12} parent=34 // pred_check_branch
        %252 = sbr.rel (%p250) target = $region39
      $region38: #{custom-call.12} parent=34 // pred_region
        %s253 = ssub.s32 %s248, 1
        %s254 = smul.u32 %s253, 128
        %s255 = sshra.s32 %s254, 4
        %s256 = scalar_lea.vmem [#allocation1], %s255
        %v257 = vld [vmem:[#allocation1] sm:$0xff]
        // While loop
        $region40: #{custom-call.12} parent=38 // loop_pre_header
          _
        $region41: #{custom-call.12} parent=38 // loop_header
          %s258 = sphi [#allocation1], %s280
          %s259 = sphi %s1, %s281
          %v260 = vphi %v257, %v282
          %s261 = ssub.s32 %s256, 64
          %p262 = scmp.gt.s32.totalorder %s258, %s261
        $region42: #{custom-call.12} parent=38 // loop_header_branch
          %264 = sbr.rel (%p262) target = $region46
        $region43: #{custom-call.12} parent=38 // loop_body
          %265 = vst [vmem:[%s259] sm:$0xff] %v260
          %v266 = vld [vmem:[%s258 + $0x8] sm:$0xff]
          %267 = vst [vmem:[%s259 + $0x8] sm:$0xff] %v266
          %v268 = vld [vmem:[%s258 + $0x10] sm:$0xff]
          %269 = vst [vmem:[%s259 + $0x10] sm:$0xff] %v268
          %v270 = vld [vmem:[%s258 + $0x18] sm:$0xff]
          %271 = vst [vmem:[%s259 + $0x18] sm:$0xff] %v270
          %v272 = vld [vmem:[%s258 + $0x20] sm:$0xff]
          %273 = vst [vmem:[%s259 + $0x20] sm:$0xff] %v272
          %v274 = vld [vmem:[%s258 + $0x28] sm:$0xff]
          %275 = vst [vmem:[%s259 + $0x28] sm:$0xff] %v274
          %v276 = vld [vmem:[%s258 + $0x30] sm:$0xff]
          %277 = vst [vmem:[%s259 + $0x30] sm:$0xff] %v276
          %v278 = vld [vmem:[%s258 + $0x38] sm:$0xff]
          %279 = vst [vmem:[%s259 + $0x38] sm:$0xff] %v278
        $region44: #{custom-call.12} parent=38 // loop_footer
          %s280 = scalar_lea.vmem %s258, 64
          %s281 = scalar_lea.vmem %s259, 64
          %v282 = vld [vmem:[%s258 + $0x40] sm:$0xff]
        $region45: #{custom-call.12} parent=38 // loop_footer_branch
          %283 = sbr.rel target = $region41
        $region46: #{custom-call.12} parent=38 // loop_exit
          _
        // While loop
        $region47: #{custom-call.12} parent=38 // loop_pre_header
          _
        $region48: #{custom-call.12} parent=38 // loop_header
          %s284 = sphi %s258, %s292
          %s285 = sphi %s259, %s293
          %v286 = vphi %v260, %v286
          %p287 = scmp.gt.s32.totalorder %s284, %s256
        $region49: #{custom-call.12} parent=38 // loop_header_branch
          %289 = sbr.rel (%p287) target = $region53
        $region50: #{custom-call.12} parent=38 // loop_body
          %v290 = vld [vmem:[%s284] sm:$0xff]
          %291 = vst [vmem:[%s285] sm:$0xff] %v290
        $region51: #{custom-call.12} parent=38 // loop_footer
          %s292 = scalar_lea.vmem %s284, 8
          %s293 = scalar_lea.vmem %s285, 8
        $region52: #{custom-call.12} parent=38 // loop_footer_branch
          %294 = sbr.rel target = $region48
        $region53: #{custom-call.12} parent=38 // loop_exit
          _
      $region39: #{custom-call.12} parent=34 // pred_fallthru
        _
      %s295 = sand.u32 8, 7
      %s296 = sshllo.u32 0, %s295
      %s297 = smul.u32 %s248, 128
      %s298 = sshra.s32 %s297, 4
      %s299 = scalar_lea.vmem %s1, %s298
      %s300 = smul.u32 %s248, 128
      %s301 = sshra.s32 %s300, 4
      %s302 = scalar_lea.vmem [#allocation1], %s301
      %v303 = vld [vmem:[%s302] sm:%s296]
      %304 = vst [vmem:[%s299] sm:%s296] %v303
    $region35: #{custom-call.12} parent=1 // pred_fallthru
      _
    // Predicated region
    $region54: #{custom-call.12} parent=1 // pred_check
      _
    $region55: #{custom-call.12} parent=1 // pred_check_branch
      %306 = sbr.rel (0) target = $region57
    $region56: #{custom-call.12} parent=1 // pred_region
      %s308 = ssub.s32 16, 16
      %309 = vsyncadd [#allocation4], %s308
      %s310 = sshll.u32 [#allocation3], 4
      %s311 = int_to_ptr.vmem [resolvable:$true] %s310
      %313 = dma.vmem_to_hbm [thread:$0]  %s311, 16, %s2, [#allocation4]
    $region57: #{custom-call.12} parent=1 // pred_fallthru
      _
    // Predicated region
    $region58: #{custom-call.12} parent=1 // pred_check
      _
    $region59: #{custom-call.12} parent=1 // pred_check_branch
      %315 = sbr.rel (0) target = $region61
    $region60: #{custom-call.12} parent=1 // pred_region
      %s317 = ssub.s32 16, 16
      %318 = vsyncadd [#allocation7], %s317
      %s319 = sshll.u32 [#allocation6], 4
      %s320 = int_to_ptr.vmem [resolvable:$true] %s319
      %322 = dma.vmem_to_hbm [thread:$0]  %s320, 16, %s3, [#allocation7]
    $region61: #{custom-call.12} parent=1 // pred_fallthru
      _
    // Predicated region
    $region62: #{custom-call.12} parent=1 // pred_check
      _
    $region63: #{custom-call.12} parent=1 // pred_check_branch
      %324 = sbr.rel (0) target = $region65
    $region64: #{custom-call.12} parent=1 // pred_region
      %325 = dma.done [#allocation4], 16
    $region65: #{custom-call.12} parent=1 // pred_fallthru
      _
    // Predicated region
    $region66: #{custom-call.12} parent=1 // pred_check
      _
    $region67: #{custom-call.12} parent=1 // pred_check_branch
      %327 = sbr.rel (0) target = $region69
    $region68: #{custom-call.12} parent=1 // pred_region
      %328 = dma.done [#allocation7], 16
    $region69: #{custom-call.12} parent=1 // pred_fallthru
      _
    %329 = vsyncpa [#allocation4], 1
    %330 = vsyncpa [#allocation7], 1

// kernel: flownet_forward.1
$region0: #{flownet_forward.1}
  #allocation0 [shape = 'u32[]', space=smem, size = 0x4, offset = 0x4, fixed_abs, tag = 'smem constant byte address 0x4 - core index']
  #allocation1 [shape = 'u32[144,128]{1,0:T(1,128)}', space=vmem, size = 0x12000, scoped, tag = 'internal scratch']
  #allocation2 [shape = 'f32[32,128]{1,0:T(8,128)}', space=vmem, size = 0x4000, scoped, tag = 'scratch operand']
  #allocation3 [shape = 'f32[8,1]{1,0:T(8,128)}', space=vmem, size = 0x1000, scoped, tag = 'scratch operand']
  %s0 = inlined_call_operand.vmem [shape: f32[8,32], index: 0, kind: input, shape index: {}]
  %s1 = inlined_call_operand.vmem [shape: f32[1,128], index: 1, kind: input, shape index: {}]
  %s2 = inlined_call_operand.vmem [shape: f32[32,128], index: 2, kind: input, shape index: {}]
  %s3 = inlined_call_operand.vmem [shape: f32[32,128], index: 3, kind: input, shape index: {}]
  %s4 = inlined_call_operand.vmem [shape: f32[3,1,128], index: 4, kind: input, shape index: {}]
  %s5 = inlined_call_operand.vmem [shape: f32[3,1,128], index: 5, kind: input, shape index: {}]
  %s6 = inlined_call_operand.vmem [shape: f32[3,128,128], index: 6, kind: input, shape index: {}]
  %s7 = inlined_call_operand.vmem [shape: f32[3,128,128], index: 7, kind: input, shape index: {}]
  %s8 = inlined_call_operand.vmem [shape: f32[3,128,128], index: 8, kind: input, shape index: {}]
  %s9 = inlined_call_operand.vmem [shape: f32[3,1,128], index: 9, kind: input, shape index: {}]
  %s10 = inlined_call_operand.vmem [shape: f32[3,128,128], index: 10, kind: input, shape index: {}]
  %s11 = inlined_call_operand.vmem [shape: f32[3,1,128], index: 11, kind: input, shape index: {}]
  %s12 = inlined_call_operand.vmem [shape: f32[3,128,128], index: 12, kind: input, shape index: {}]
  %s13 = inlined_call_operand.vmem [shape: f32[3,1,128], index: 13, kind: input, shape index: {}]
  %s14 = inlined_call_operand.vmem [shape: f32[3,128,128], index: 14, kind: input, shape index: {}]
  %s15 = inlined_call_operand.vmem [shape: f32[3,1,128], index: 15, kind: input, shape index: {}]
  %s16 = inlined_call_operand.vmem [shape: f32[32,128], index: 16, kind: output, shape index: {0}]
  %s17 = inlined_call_operand.vmem [shape: f32[8,1], index: 17, kind: output, shape index: {1}]
  %18 = xla_tuple %s16, %s17
  %s19 = sld [smem:[#allocation0]]
  $region113: #{flownet_forward.1} parent=0
    _
  %s21 = ssub.s32 1, %s19
  %s22 = scalar_select 0, %s21, %s19
  loop: start=0, step=1, limit=5
  $region2: #{flownet_forward.1} parent=0 // loop_pre_header
    _
  $region3: #{flownet_forward.1} parent=0 // loop_header
    %s24 = sphi 0, %s28
    %p25 = scmp.ge.s32.totalorder %s24, 5
    %s32 = sphi 0, %s32
    %s34 = sphi 0, %s32
    %s35 = sphi 0, %s34
    %s49 = sphi 0, %s35
    %s53 = sphi 0, %s53
    %s55 = sphi 0, %s53
    %s56 = sphi 0, %s55
    %s70 = sphi 0, %s56
    %s74 = sphi 0, %s74
    %s76 = sphi 0, %s74
    %s77 = sphi 0, %s76
    %s91 = sphi 0, %s77
    %s95 = sphi 0, %s95
    %s97 = sphi 0, %s95
    %s98 = sphi 0, %s97
    %s112 = sphi 0, %s98
    %s118 = sphi 0, %s120
    %s121 = sphi 0, %s118
    %s122 = sphi 0, %s121
    %s138 = sphi 0, %s122
    %s144 = sphi 0, %s146
    %s147 = sphi 0, %s144
    %s148 = sphi 0, %s147
    %s164 = sphi 0, %s148
    %s170 = sphi 0, %s172
    %s173 = sphi 0, %s170
    %s174 = sphi 0, %s173
    %s190 = sphi 0, %s174
    %s196 = sphi 0, %s198
    %s199 = sphi 0, %s196
    %s200 = sphi 0, %s199
    %s216 = sphi 0, %s200
    %s222 = sphi 0, %s224
    %s225 = sphi 0, %s222
    %s226 = sphi 0, %s225
    %s242 = sphi 0, %s226
    %s248 = sphi 0, %s250
    %s251 = sphi 0, %s248
    %s252 = sphi 0, %s251
    %s268 = sphi 0, %s252
    %s274 = sphi 0, %s276
    %s277 = sphi 0, %s274
    %s278 = sphi 0, %s277
    %s294 = sphi 0, %s278
    %s300 = sphi 0, %s302
    %s303 = sphi 0, %s300
    %s304 = sphi 0, %s303
    %s320 = sphi 0, %s304
    %s326 = sphi 0, %s328
    %s329 = sphi 0, %s326
    %s330 = sphi 0, %s329
    %s346 = sphi 0, %s330
    %s352 = sphi 0, %s354
    %s355 = sphi 0, %s352
    %s356 = sphi 0, %s355
    %s372 = sphi 0, %s356
    %s378 = sphi 0, %s380
    %s381 = sphi 0, %s378
    %s382 = sphi 0, %s381
    %s398 = sphi 0, %s382
    %s404 = sphi 0, %s406
    %s407 = sphi 0, %s404
    %s408 = sphi 0, %s407
    %s424 = sphi 0, %s408
    %s428 = sphi 0, %s428
    %s430 = sphi 0, %s428
    %s431 = sphi 0, %s430
    %s445 = sphi 0, %s431
    %s449 = sphi 0, %s449
    %s451 = sphi 0, %s449
    %s452 = sphi 0, %s451
    %s466 = sphi 0, %s452
  $region4: #{flownet_forward.1} parent=0 // loop_header_branch
    %27 = sbr.rel (%p25) target = $region8
  $region5: #{flownet_forward.1} parent=0 // loop_body
    %s29 = ssub.s32 %s24, 1
    %s30 = ssub.s32 %s24, 2
    %s31 = sadd.s32 %s24, 1
    %s33 = sadd.s32 %s32, 1
    %p36 = scmp.eq.s32.totalorder %s24, 2
    %p37 = scmp.ne.s32.totalorder %s32, %s34
    %p38 = scmp.eq.s32.totalorder %s24, 0
    %p39 = por %p37, %p38
    %p40 = scmp.ne.s32.totalorder %s32, %s34
    %p41 = scmp.eq.s32.totalorder %s29, 2
    %p42 = por %p40, %p41
    %p43 = scmp.ne.s32.totalorder %s34, %s35
    %p44 = scmp.eq.s32.totalorder %s29, 0
    %p45 = por %p43, %p44
    %p46 = scmp.ne.s32.totalorder %s34, %s35
    %p47 = scmp.eq.s32.totalorder %s30, 2
    %p48 = por %p46, %p47
    %p50 = scmp.ne.s32.totalorder %s35, %s49
    %p51 = scmp.eq.s32.totalorder %s30, 0
    %p52 = por %p50, %p51
    %s54 = sadd.s32 %s53, 1
    %p57 = scmp.eq.s32.totalorder %s24, 2
    %p58 = scmp.ne.s32.totalorder %s53, %s55
    %p59 = scmp.eq.s32.totalorder %s24, 0
    %p60 = por %p58, %p59
    %p61 = scmp.ne.s32.totalorder %s53, %s55
    %p62 = scmp.eq.s32.totalorder %s29, 2
    %p63 = por %p61, %p62
    %p64 = scmp.ne.s32.totalorder %s55, %s56
    %p65 = scmp.eq.s32.totalorder %s29, 0
    %p66 = por %p64, %p65
    %p67 = scmp.ne.s32.totalorder %s55, %s56
    %p68 = scmp.eq.s32.totalorder %s30, 2
    %p69 = por %p67, %p68
    %p71 = scmp.ne.s32.totalorder %s56, %s70
    %p72 = scmp.eq.s32.totalorder %s30, 0
    %p73 = por %p71, %p72
    %s75 = sadd.s32 %s74, 1
    %p78 = scmp.eq.s32.totalorder %s24, 2
    %p79 = scmp.ne.s32.totalorder %s74, %s76
    %p80 = scmp.eq.s32.totalorder %s24, 0
    %p81 = por %p79, %p80
    %p82 = scmp.ne.s32.totalorder %s74, %s76
    %p83 = scmp.eq.s32.totalorder %s29, 2
    %p84 = por %p82, %p83
    %p85 = scmp.ne.s32.totalorder %s76, %s77
    %p86 = scmp.eq.s32.totalorder %s29, 0
    %p87 = por %p85, %p86
    %p88 = scmp.ne.s32.totalorder %s76, %s77
    %p89 = scmp.eq.s32.totalorder %s30, 2
    %p90 = por %p88, %p89
    %p92 = scmp.ne.s32.totalorder %s77, %s91
    %p93 = scmp.eq.s32.totalorder %s30, 0
    %p94 = por %p92, %p93
    %s96 = sadd.s32 %s95, 1
    %p99 = scmp.eq.s32.totalorder %s24, 2
    %p100 = scmp.ne.s32.totalorder %s95, %s97
    %p101 = scmp.eq.s32.totalorder %s24, 0
    %p102 = por %p100, %p101
    %p103 = scmp.ne.s32.totalorder %s95, %s97
    %p104 = scmp.eq.s32.totalorder %s29, 2
    %p105 = por %p103, %p104
    %p106 = scmp.ne.s32.totalorder %s97, %s98
    %p107 = scmp.eq.s32.totalorder %s29, 0
    %p108 = por %p106, %p107
    %p109 = scmp.ne.s32.totalorder %s97, %s98
    %p110 = scmp.eq.s32.totalorder %s30, 2
    %p111 = por %p109, %p110
    %p113 = scmp.ne.s32.totalorder %s98, %s112
    %p114 = scmp.eq.s32.totalorder %s30, 0
    %p115 = por %p113, %p114
    %s116 = ssub.s32 %s24, %s31
    %p117 = scmp.eq.s32.totalorder %s116, 0
    %s119 = sadd.s32 %s118, 1
    %s120 = scalar_select %p117, %s118, %s119
    %p123 = pneg %p117
    %p124 = scmp.eq.s32.totalorder %s24, 2
    %p125 = por %p123, %p124
    %p126 = scmp.ne.s32.totalorder %s118, %s121
    %p127 = scmp.eq.s32.totalorder %s24, 0
    %p128 = por %p126, %p127
    %p129 = scmp.ne.s32.totalorder %s118, %s121
    %p130 = scmp.eq.s32.totalorder %s29, 2
    %p131 = por %p129, %p130
    %p132 = scmp.ne.s32.totalorder %s121, %s122
    %p133 = scmp.eq.s32.totalorder %s29, 0
    %p134 = por %p132, %p133
    %p135 = scmp.ne.s32.totalorder %s121, %s122
    %p136 = scmp.eq.s32.totalorder %s30, 2
    %p137 = por %p135, %p136
    %p139 = scmp.ne.s32.totalorder %s122, %s138
    %p140 = scmp.eq.s32.totalorder %s30, 0
    %p141 = por %p139, %p140
    %s142 = ssub.s32 %s24, %s31
    %p143 = scmp.eq.s32.totalorder %s142, 0
    %s145 = sadd.s32 %s144, 1
    %s146 = scalar_select %p143, %s144, %s145
    %p149 = pneg %p143
    %p150 = scmp.eq.s32.totalorder %s24, 2
    %p151 = por %p149, %p150
    %p152 = scmp.ne.s32.totalorder %s144, %s147
    %p153 = scmp.eq.s32.totalorder %s24, 0
    %p154 = por %p152, %p153
    %p155 = scmp.ne.s32.totalorder %s144, %s147
    %p156 = scmp.eq.s32.totalorder %s29, 2
    %p157 = por %p155, %p156
    %p158 = scmp.ne.s32.totalorder %s147, %s148
    %p159 = scmp.eq.s32.totalorder %s29, 0
    %p160 = por %p158, %p159
    %p161 = scmp.ne.s32.totalorder %s147, %s148
    %p162 = scmp.eq.s32.totalorder %s30, 2
    %p163 = por %p161, %p162
    %p165 = scmp.ne.s32.totalorder %s148, %s164
    %p166 = scmp.eq.s32.totalorder %s30, 0
    %p167 = por %p165, %p166
    %s168 = ssub.s32 %s24, %s31
    %p169 = scmp.eq.s32.totalorder %s168, 0
    %s171 = sadd.s32 %s170, 1
    %s172 = scalar_select %p169, %s170, %s171
    %p175 = pneg %p169
    %p176 = scmp.eq.s32.totalorder %s24, 2
    %p177 = por %p175, %p176
    %p178 = scmp.ne.s32.totalorder %s170, %s173
    %p179 = scmp.eq.s32.totalorder %s24, 0
    %p180 = por %p178, %p179
    %p181 = scmp.ne.s32.totalorder %s170, %s173
    %p182 = scmp.eq.s32.totalorder %s29, 2
    %p183 = por %p181, %p182
    %p184 = scmp.ne.s32.totalorder %s173, %s174
    %p185 = scmp.eq.s32.totalorder %s29, 0
    %p186 = por %p184, %p185
    %p187 = scmp.ne.s32.totalorder %s173, %s174
    %p188 = scmp.eq.s32.totalorder %s30, 2
    %p189 = por %p187, %p188
    %p191 = scmp.ne.s32.totalorder %s174, %s190
    %p192 = scmp.eq.s32.totalorder %s30, 0
    %p193 = por %p191, %p192
    %s194 = ssub.s32 %s24, %s31
    %p195 = scmp.eq.s32.totalorder %s194, 0
    %s197 = sadd.s32 %s196, 1
    %s198 = scalar_select %p195, %s196, %s197
    %p201 = pneg %p195
    %p202 = scmp.eq.s32.totalorder %s24, 2
    %p203 = por %p201, %p202
    %p204 = scmp.ne.s32.totalorder %s196, %s199
    %p205 = scmp.eq.s32.totalorder %s24, 0
    %p206 = por %p204, %p205
    %p207 = scmp.ne.s32.totalorder %s196, %s199
    %p208 = scmp.eq.s32.totalorder %s29, 2
    %p209 = por %p207, %p208
    %p210 = scmp.ne.s32.totalorder %s199, %s200
    %p211 = scmp.eq.s32.totalorder %s29, 0
    %p212 = por %p210, %p211
    %p213 = scmp.ne.s32.totalorder %s199, %s200
    %p214 = scmp.eq.s32.totalorder %s30, 2
    %p215 = por %p213, %p214
    %p217 = scmp.ne.s32.totalorder %s200, %s216
    %p218 = scmp.eq.s32.totalorder %s30, 0
    %p219 = por %p217, %p218
    %s220 = ssub.s32 %s24, %s31
    %p221 = scmp.eq.s32.totalorder %s220, 0
    %s223 = sadd.s32 %s222, 1
    %s224 = scalar_select %p221, %s222, %s223
    %p227 = pneg %p221
    %p228 = scmp.eq.s32.totalorder %s24, 2
    %p229 = por %p227, %p228
    %p230 = scmp.ne.s32.totalorder %s222, %s225
    %p231 = scmp.eq.s32.totalorder %s24, 0
    %p232 = por %p230, %p231
    %p233 = scmp.ne.s32.totalorder %s222, %s225
    %p234 = scmp.eq.s32.totalorder %s29, 2
    %p235 = por %p233, %p234
    %p236 = scmp.ne.s32.totalorder %s225, %s226
    %p237 = scmp.eq.s32.totalorder %s29, 0
    %p238 = por %p236, %p237
    %p239 = scmp.ne.s32.totalorder %s225, %s226
    %p240 = scmp.eq.s32.totalorder %s30, 2
    %p241 = por %p239, %p240
    %p243 = scmp.ne.s32.totalorder %s226, %s242
    %p244 = scmp.eq.s32.totalorder %s30, 0
    %p245 = por %p243, %p244
    %s246 = ssub.s32 %s24, %s31
    %p247 = scmp.eq.s32.totalorder %s246, 0
    %s249 = sadd.s32 %s248, 1
    %s250 = scalar_select %p247, %s248, %s249
    %p253 = pneg %p247
    %p254 = scmp.eq.s32.totalorder %s24, 2
    %p255 = por %p253, %p254
    %p256 = scmp.ne.s32.totalorder %s248, %s251
    %p257 = scmp.eq.s32.totalorder %s24, 0
    %p258 = por %p256, %p257
    %p259 = scmp.ne.s32.totalorder %s248, %s251
    %p260 = scmp.eq.s32.totalorder %s29, 2
    %p261 = por %p259, %p260
    %p262 = scmp.ne.s32.totalorder %s251, %s252
    %p263 = scmp.eq.s32.totalorder %s29, 0
    %p264 = por %p262, %p263
    %p265 = scmp.ne.s32.totalorder %s251, %s252
    %p266 = scmp.eq.s32.totalorder %s30, 2
    %p267 = por %p265, %p266
    %p269 = scmp.ne.s32.totalorder %s252, %s268
    %p270 = scmp.eq.s32.totalorder %s30, 0
    %p271 = por %p269, %p270
    %s272 = ssub.s32 %s24, %s31
    %p273 = scmp.eq.s32.totalorder %s272, 0
    %s275 = sadd.s32 %s274, 1
    %s276 = scalar_select %p273, %s274, %s275
    %p279 = pneg %p273
    %p280 = scmp.eq.s32.totalorder %s24, 2
    %p281 = por %p279, %p280
    %p282 = scmp.ne.s32.totalorder %s274, %s277
    %p283 = scmp.eq.s32.totalorder %s24, 0
    %p284 = por %p282, %p283
    %p285 = scmp.ne.s32.totalorder %s274, %s277
    %p286 = scmp.eq.s32.totalorder %s29, 2
    %p287 = por %p285, %p286
    %p288 = scmp.ne.s32.totalorder %s277, %s278
    %p289 = scmp.eq.s32.totalorder %s29, 0
    %p290 = por %p288, %p289
    %p291 = scmp.ne.s32.totalorder %s277, %s278
    %p292 = scmp.eq.s32.totalorder %s30, 2
    %p293 = por %p291, %p292
    %p295 = scmp.ne.s32.totalorder %s278, %s294
    %p296 = scmp.eq.s32.totalorder %s30, 0
    %p297 = por %p295, %p296
    %s298 = ssub.s32 %s24, %s31
    %p299 = scmp.eq.s32.totalorder %s298, 0
    %s301 = sadd.s32 %s300, 1
    %s302 = scalar_select %p299, %s300, %s301
    %p305 = pneg %p299
    %p306 = scmp.eq.s32.totalorder %s24, 2
    %p307 = por %p305, %p306
    %p308 = scmp.ne.s32.totalorder %s300, %s303
    %p309 = scmp.eq.s32.totalorder %s24, 0
    %p310 = por %p308, %p309
    %p311 = scmp.ne.s32.totalorder %s300, %s303
    %p312 = scmp.eq.s32.totalorder %s29, 2
    %p313 = por %p311, %p312
    %p314 = scmp.ne.s32.totalorder %s303, %s304
    %p315 = scmp.eq.s32.totalorder %s29, 0
    %p316 = por %p314, %p315
    %p317 = scmp.ne.s32.totalorder %s303, %s304
    %p318 = scmp.eq.s32.totalorder %s30, 2
    %p319 = por %p317, %p318
    %p321 = scmp.ne.s32.totalorder %s304, %s320
    %p322 = scmp.eq.s32.totalorder %s30, 0
    %p323 = por %p321, %p322
    %s324 = ssub.s32 %s24, %s31
    %p325 = scmp.eq.s32.totalorder %s324, 0
    %s327 = sadd.s32 %s326, 1
    %s328 = scalar_select %p325, %s326, %s327
    %p331 = pneg %p325
    %p332 = scmp.eq.s32.totalorder %s24, 2
    %p333 = por %p331, %p332
    %p334 = scmp.ne.s32.totalorder %s326, %s329
    %p335 = scmp.eq.s32.totalorder %s24, 0
    %p336 = por %p334, %p335
    %p337 = scmp.ne.s32.totalorder %s326, %s329
    %p338 = scmp.eq.s32.totalorder %s29, 2
    %p339 = por %p337, %p338
    %p340 = scmp.ne.s32.totalorder %s329, %s330
    %p341 = scmp.eq.s32.totalorder %s29, 0
    %p342 = por %p340, %p341
    %p343 = scmp.ne.s32.totalorder %s329, %s330
    %p344 = scmp.eq.s32.totalorder %s30, 2
    %p345 = por %p343, %p344
    %p347 = scmp.ne.s32.totalorder %s330, %s346
    %p348 = scmp.eq.s32.totalorder %s30, 0
    %p349 = por %p347, %p348
    %s350 = ssub.s32 %s24, %s31
    %p351 = scmp.eq.s32.totalorder %s350, 0
    %s353 = sadd.s32 %s352, 1
    %s354 = scalar_select %p351, %s352, %s353
    %p357 = pneg %p351
    %p358 = scmp.eq.s32.totalorder %s24, 2
    %p359 = por %p357, %p358
    %p360 = scmp.ne.s32.totalorder %s352, %s355
    %p361 = scmp.eq.s32.totalorder %s24, 0
    %p362 = por %p360, %p361
    %p363 = scmp.ne.s32.totalorder %s352, %s355
    %p364 = scmp.eq.s32.totalorder %s29, 2
    %p365 = por %p363, %p364
    %p366 = scmp.ne.s32.totalorder %s355, %s356
    %p367 = scmp.eq.s32.totalorder %s29, 0
    %p368 = por %p366, %p367
    %p369 = scmp.ne.s32.totalorder %s355, %s356
    %p370 = scmp.eq.s32.totalorder %s30, 2
    %p371 = por %p369, %p370
    %p373 = scmp.ne.s32.totalorder %s356, %s372
    %p374 = scmp.eq.s32.totalorder %s30, 0
    %p375 = por %p373, %p374
    %s376 = ssub.s32 %s24, %s31
    %p377 = scmp.eq.s32.totalorder %s376, 0
    %s379 = sadd.s32 %s378, 1
    %s380 = scalar_select %p377, %s378, %s379
    %p383 = pneg %p377
    %p384 = scmp.eq.s32.totalorder %s24, 2
    %p385 = por %p383, %p384
    %p386 = scmp.ne.s32.totalorder %s378, %s381
    %p387 = scmp.eq.s32.totalorder %s24, 0
    %p388 = por %p386, %p387
    %p389 = scmp.ne.s32.totalorder %s378, %s381
    %p390 = scmp.eq.s32.totalorder %s29, 2
    %p391 = por %p389, %p390
    %p392 = scmp.ne.s32.totalorder %s381, %s382
    %p393 = scmp.eq.s32.totalorder %s29, 0
    %p394 = por %p392, %p393
    %p395 = scmp.ne.s32.totalorder %s381, %s382
    %p396 = scmp.eq.s32.totalorder %s30, 2
    %p397 = por %p395, %p396
    %p399 = scmp.ne.s32.totalorder %s382, %s398
    %p400 = scmp.eq.s32.totalorder %s30, 0
    %p401 = por %p399, %p400
    %s402 = ssub.s32 %s24, %s31
    %p403 = scmp.eq.s32.totalorder %s402, 0
    %s405 = sadd.s32 %s404, 1
    %s406 = scalar_select %p403, %s404, %s405
    %p409 = pneg %p403
    %p410 = scmp.eq.s32.totalorder %s24, 2
    %p411 = por %p409, %p410
    %p412 = scmp.ne.s32.totalorder %s404, %s407
    %p413 = scmp.eq.s32.totalorder %s24, 0
    %p414 = por %p412, %p413
    %p415 = scmp.ne.s32.totalorder %s404, %s407
    %p416 = scmp.eq.s32.totalorder %s29, 2
    %p417 = por %p415, %p416
    %p418 = scmp.ne.s32.totalorder %s407, %s408
    %p419 = scmp.eq.s32.totalorder %s29, 0
    %p420 = por %p418, %p419
    %p421 = scmp.ne.s32.totalorder %s407, %s408
    %p422 = scmp.eq.s32.totalorder %s30, 2
    %p423 = por %p421, %p422
    %p425 = scmp.ne.s32.totalorder %s408, %s424
    %p426 = scmp.eq.s32.totalorder %s30, 0
    %p427 = por %p425, %p426
    %s429 = sadd.s32 %s428, 1
    %p432 = scmp.eq.s32.totalorder %s24, 2
    %p433 = scmp.ne.s32.totalorder %s428, %s430
    %p434 = scmp.eq.s32.totalorder %s24, 0
    %p435 = por %p433, %p434
    %p436 = scmp.ne.s32.totalorder %s428, %s430
    %p437 = scmp.eq.s32.totalorder %s29, 2
    %p438 = por %p436, %p437
    %p439 = scmp.ne.s32.totalorder %s430, %s431
    %p440 = scmp.eq.s32.totalorder %s29, 0
    %p441 = por %p439, %p440
    %p442 = scmp.ne.s32.totalorder %s430, %s431
    %p443 = scmp.eq.s32.totalorder %s30, 2
    %p444 = por %p442, %p443
    %p446 = scmp.ne.s32.totalorder %s431, %s445
    %p447 = scmp.eq.s32.totalorder %s30, 0
    %p448 = por %p446, %p447
    %s450 = sadd.s32 %s449, 1
    %p453 = scmp.eq.s32.totalorder %s24, 2
    %p454 = scmp.ne.s32.totalorder %s449, %s451
    %p455 = scmp.eq.s32.totalorder %s24, 0
    %p456 = por %p454, %p455
    %p457 = scmp.ne.s32.totalorder %s449, %s451
    %p458 = scmp.eq.s32.totalorder %s29, 2
    %p459 = por %p457, %p458
    %p460 = scmp.ne.s32.totalorder %s451, %s452
    %p461 = scmp.eq.s32.totalorder %s29, 0
    %p462 = por %p460, %p461
    %p463 = scmp.ne.s32.totalorder %s451, %s452
    %p464 = scmp.eq.s32.totalorder %s30, 2
    %p465 = por %p463, %p464
    %p467 = scmp.ne.s32.totalorder %s452, %s466
    %p468 = scmp.eq.s32.totalorder %s30, 0
    %p469 = por %p467, %p468
    %p470 = scmp.le.s32.totalorder 1, %s24
    %p471 = scmp.lt.s32.totalorder %s24, 4
    %p472 = pnand %p470, %p471
    %p473 = pneg %p472
    // Predicated region
    $region9: #{flownet_forward.1} parent=5 // pred_check
      _
    $region10: #{flownet_forward.1} parent=5 // pred_check_branch
      %475 = sbr.rel (%p472) target = $region12
    $region11: #{flownet_forward.1} parent=5 // pred_region
      %s476 = ssub.s32 %s24, 1
      // Predicated region
      $region13: #{flownet_forward.1} parent=11 // pred_check
        %p477 = pneg %p45
      $region14: #{flownet_forward.1} parent=11 // pred_check_branch
        %479 = sbr.rel (%p477) target = $region16
      $region15: #{flownet_forward.1} parent=11 // pred_region
        _
      $region16: #{flownet_forward.1} parent=11 // pred_fallthru
        _
      // Predicated region
      $region17: #{flownet_forward.1} parent=11 // pred_check
        %p480 = pneg %p66
      $region18: #{flownet_forward.1} parent=11 // pred_check_branch
        %482 = sbr.rel (%p480) target = $region20
      $region19: #{flownet_forward.1} parent=11 // pred_region
        _
      $region20: #{flownet_forward.1} parent=11 // pred_fallthru
        _
      // Predicated region
      $region21: #{flownet_forward.1} parent=11 // pred_check
        %p483 = pneg %p87
      $region22: #{flownet_forward.1} parent=11 // pred_check_branch
        %485 = sbr.rel (%p483) target = $region24
      $region23: #{flownet_forward.1} parent=11 // pred_region
        _
      $region24: #{flownet_forward.1} parent=11 // pred_fallthru
        _
      // Predicated region
      $region25: #{flownet_forward.1} parent=11 // pred_check
        %p486 = pneg %p108
      $region26: #{flownet_forward.1} parent=11 // pred_check_branch
        %488 = sbr.rel (%p486) target = $region28
      $region27: #{flownet_forward.1} parent=11 // pred_region
        _
      $region28: #{flownet_forward.1} parent=11 // pred_fallthru
        _
    $region12: #{flownet_forward.1} parent=5 // pred_fallthru
      _
    %p489 = scmp.lt.s32.totalorder %s24, 3
    // Predicated region
    $region29: #{flownet_forward.1} parent=5 // pred_check
      %p490 = pneg %p489
    $region30: #{flownet_forward.1} parent=5 // pred_check_branch
      %492 = sbr.rel (%p490) target = $region32
    $region31: #{flownet_forward.1} parent=5 // pred_region
      // Predicated region
      $region33: #{flownet_forward.1} parent=31 // pred_check
        %p493 = pneg %p128
      $region34: #{flownet_forward.1} parent=31 // pred_check_branch
        %495 = sbr.rel (%p493) target = $region36
      $region35: #{flownet_forward.1} parent=31 // pred_region
        %p496 = scmp.lt.s32.totalorder %s24, 2
        %s497 = scalar_select %p496, %s24, 2
        %s498 = scalar_lea.vmem %s4, %s497
      $region36: #{flownet_forward.1} parent=31 // pred_fallthru
        _
      // Predicated region
      $region37: #{flownet_forward.1} parent=31 // pred_check
        %p499 = pneg %p154
      $region38: #{flownet_forward.1} parent=31 // pred_check_branch
        %501 = sbr.rel (%p499) target = $region40
      $region39: #{flownet_forward.1} parent=31 // pred_region
        %p502 = scmp.lt.s32.totalorder %s24, 2
        %s503 = scalar_select %p502, %s24, 2
        %s504 = scalar_lea.vmem %s5, %s503
      $region40: #{flownet_forward.1} parent=31 // pred_fallthru
        _
      // Predicated region
      $region41: #{flownet_forward.1} parent=31 // pred_check
        %p505 = pneg %p180
      $region42: #{flownet_forward.1} parent=31 // pred_check_branch
        %507 = sbr.rel (%p505) target = $region44
      $region43: #{flownet_forward.1} parent=31 // pred_region
        %p508 = scmp.lt.s32.totalorder %s24, 2
        %s509 = scalar_select %p508, %s24, 2
        %s510 = smul.addr %s509, 16
        %s511 = smul.addr %s510, 8
        %s512 = scalar_lea.vmem %s6, %s511
      $region44: #{flownet_forward.1} parent=31 // pred_fallthru
        _
      // Predicated region
      $region45: #{flownet_forward.1} parent=31 // pred_check
        %p513 = pneg %p206
      $region46: #{flownet_forward.1} parent=31 // pred_check_branch
        %515 = sbr.rel (%p513) target = $region48
      $region47: #{flownet_forward.1} parent=31 // pred_region
        %p516 = scmp.lt.s32.totalorder %s24, 2
        %s517 = scalar_select %p516, %s24, 2
        %s518 = smul.addr %s517, 16
        %s519 = smul.addr %s518, 8
        %s520 = scalar_lea.vmem %s7, %s519
      $region48: #{flownet_forward.1} parent=31 // pred_fallthru
        _
      // Predicated region
      $region49: #{flownet_forward.1} parent=31 // pred_check
        %p521 = pneg %p232
      $region50: #{flownet_forward.1} parent=31 // pred_check_branch
        %523 = sbr.rel (%p521) target = $region52
      $region51: #{flownet_forward.1} parent=31 // pred_region
        %p524 = scmp.lt.s32.totalorder %s24, 2
        %s525 = scalar_select %p524, %s24, 2
        %s526 = smul.addr %s525, 16
        %s527 = smul.addr %s526, 8
        %s528 = scalar_lea.vmem %s8, %s527
      $region52: #{flownet_forward.1} parent=31 // pred_fallthru
        _
      // Predicated region
      $region53: #{flownet_forward.1} parent=31 // pred_check
        %p529 = pneg %p258
      $region54: #{flownet_forward.1} parent=31 // pred_check_branch
        %531 = sbr.rel (%p529) target = $region56
      $region55: #{flownet_forward.1} parent=31 // pred_region
        %p532 = scmp.lt.s32.totalorder %s24, 2
        %s533 = scalar_select %p532, %s24, 2
        %s534 = scalar_lea.vmem %s9, %s533
      $region56: #{flownet_forward.1} parent=31 // pred_fallthru
        _
      // Predicated region
      $region57: #{flownet_forward.1} parent=31 // pred_check
        %p535 = pneg %p284
      $region58: #{flownet_forward.1} parent=31 // pred_check_branch
        %537 = sbr.rel (%p535) target = $region60
      $region59: #{flownet_forward.1} parent=31 // pred_region
        %p538 = scmp.lt.s32.totalorder %s24, 2
        %s539 = scalar_select %p538, %s24, 2
        %s540 = smul.addr %s539, 16
        %s541 = smul.addr %s540, 8
        %s542 = scalar_lea.vmem %s10, %s541
      $region60: #{flownet_forward.1} parent=31 // pred_fallthru
        _
      // Predicated region
      $region61: #{flownet_forward.1} parent=31 // pred_check
        %p543 = pneg %p310
      $region62: #{flownet_forward.1} parent=31 // pred_check_branch
        %545 = sbr.rel (%p543) target = $region64
      $region63: #{flownet_forward.1} parent=31 // pred_region
        %p546 = scmp.lt.s32.totalorder %s24, 2
        %s547 = scalar_select %p546, %s24, 2
        %s548 = scalar_lea.vmem %s11, %s547
      $region64: #{flownet_forward.1} parent=31 // pred_fallthru
        _
      // Predicated region
      $region65: #{flownet_forward.1} parent=31 // pred_check
        %p549 = pneg %p336
      $region66: #{flownet_forward.1} parent=31 // pred_check_branch
        %551 = sbr.rel (%p549) target = $region68
      $region67: #{flownet_forward.1} parent=31 // pred_region
        %p552 = scmp.lt.s32.totalorder %s24, 2
        %s553 = scalar_select %p552, %s24, 2
        %s554 = smul.addr %s553, 16
        %s555 = smul.addr %s554, 8
        %s556 = scalar_lea.vmem %s12, %s555
      $region68: #{flownet_forward.1} parent=31 // pred_fallthru
        _
      // Predicated region
      $region69: #{flownet_forward.1} parent=31 // pred_check
        %p557 = pneg %p362
      $region70: #{flownet_forward.1} parent=31 // pred_check_branch
        %559 = sbr.rel (%p557) target = $region72
      $region71: #{flownet_forward.1} parent=31 // pred_region
        %p560 = scmp.lt.s32.totalorder %s24, 2
        %s561 = scalar_select %p560, %s24, 2
        %s562 = scalar_lea.vmem %s13, %s561
      $region72: #{flownet_forward.1} parent=31 // pred_fallthru
        _
      // Predicated region
      $region73: #{flownet_forward.1} parent=31 // pred_check
        %p563 = pneg %p388
      $region74: #{flownet_forward.1} parent=31 // pred_check_branch
        %565 = sbr.rel (%p563) target = $region76
      $region75: #{flownet_forward.1} parent=31 // pred_region
        %p566 = scmp.lt.s32.totalorder %s24, 2
        %s567 = scalar_select %p566, %s24, 2
        %s568 = smul.addr %s567, 16
        %s569 = smul.addr %s568, 8
        %s570 = scalar_lea.vmem %s14, %s569
      $region76: #{flownet_forward.1} parent=31 // pred_fallthru
        _
      // Predicated region
      $region77: #{flownet_forward.1} parent=31 // pred_check
        %p571 = pneg %p414
      $region78: #{flownet_forward.1} parent=31 // pred_check_branch
        %573 = sbr.rel (%p571) target = $region80
      $region79: #{flownet_forward.1} parent=31 // pred_region
        %p574 = scmp.lt.s32.totalorder %s24, 2
        %s575 = scalar_select %p574, %s24, 2
        %s576 = scalar_lea.vmem %s15, %s575
      $region80: #{flownet_forward.1} parent=31 // pred_fallthru
        _
    $region32: #{flownet_forward.1} parent=5 // pred_fallthru
      _
    %p577 = scmp.le.s32.totalorder 1, %s24
    %p578 = scmp.lt.s32.totalorder %s24, 4
    %p579 = pnand %p577, %p578
    %p580 = pneg %p579
    // Predicated region
    $region81: #{flownet_forward.1} parent=5 // pred_check
      _
    $region82: #{flownet_forward.1} parent=5 // pred_check_branch
      %582 = sbr.rel (%p579) target = $region84
    $region83: #{flownet_forward.1} parent=5 // pred_region
      %s583 = ssub.s32 %s24, 1
      %p584 = pneg %p45
      %p585 = pneg %p42
      %p586 = pneg %p66
      %p587 = pneg %p63
      %p588 = pneg %p87
      %p589 = pneg %p84
      %p590 = pneg %p108
      %p591 = pneg %p105
      %p592 = scmp.lt.s32.totalorder %s29, 2
      %s593 = scalar_select %p592, %s29, 2
      %s594 = scalar_lea.vmem %s4, %s593
      %p595 = pneg %p134
      %p596 = pneg %p131
      %p597 = scmp.lt.s32.totalorder %s29, 2
      %s598 = scalar_select %p597, %s29, 2
      %s599 = scalar_lea.vmem %s5, %s598
      %p600 = pneg %p160
      %p601 = pneg %p157
      %p602 = scmp.lt.s32.totalorder %s29, 2
      %s603 = scalar_select %p602, %s29, 2
      %s604 = smul.addr %s603, 16
      %s605 = smul.addr %s604, 8
      %s606 = scalar_lea.vmem %s6, %s605
      %p607 = pneg %p186
      %p608 = pneg %p183
      %p609 = scmp.lt.s32.totalorder %s29, 2
      %s610 = scalar_select %p609, %s29, 2
      %s611 = smul.addr %s610, 16
      %s612 = smul.addr %s611, 8
      %s613 = scalar_lea.vmem %s7, %s612
      %p614 = pneg %p212
      %p615 = pneg %p209
      %p616 = scmp.lt.s32.totalorder %s29, 2
      %s617 = scalar_select %p616, %s29, 2
      %s618 = smul.addr %s617, 16
      %s619 = smul.addr %s618, 8
      %s620 = scalar_lea.vmem %s8, %s619
      %p621 = pneg %p238
      %p622 = pneg %p235
      %p623 = scmp.lt.s32.totalorder %s29, 2
      %s624 = scalar_select %p623, %s29, 2
      %s625 = scalar_lea.vmem %s9, %s624
      %p626 = pneg %p264
      %p627 = pneg %p261
      %p628 = scmp.lt.s32.totalorder %s29, 2
      %s629 = scalar_select %p628, %s29, 2
      %s630 = smul.addr %s629, 16
      %s631 = smul.addr %s630, 8
      %s632 = scalar_lea.vmem %s10, %s631
      %p633 = pneg %p290
      %p634 = pneg %p287
      %p635 = scmp.lt.s32.totalorder %s29, 2
      %s636 = scalar_select %p635, %s29, 2
      %s637 = scalar_lea.vmem %s11, %s636
      %p638 = pneg %p316
      %p639 = pneg %p313
      %p640 = scmp.lt.s32.totalorder %s29, 2
      %s641 = scalar_select %p640, %s29, 2
      %s642 = smul.addr %s641, 16
      %s643 = smul.addr %s642, 8
      %s644 = scalar_lea.vmem %s12, %s643
      %p645 = pneg %p342
      %p646 = pneg %p339
      %p647 = scmp.lt.s32.totalorder %s29, 2
      %s648 = scalar_select %p647, %s29, 2
      %s649 = scalar_lea.vmem %s13, %s648
      %p650 = pneg %p368
      %p651 = pneg %p365
      %p652 = scmp.lt.s32.totalorder %s29, 2
      %s653 = scalar_select %p652, %s29, 2
      %s654 = smul.addr %s653, 16
      %s655 = smul.addr %s654, 8
      %s656 = scalar_lea.vmem %s14, %s655
      %p657 = pneg %p394
      %p658 = pneg %p391
      %p659 = scmp.lt.s32.totalorder %s29, 2
      %s660 = scalar_select %p659, %s29, 2
      %s661 = scalar_lea.vmem %s15, %s660
      %p662 = pneg %p420
      %p663 = pneg %p417
      %p664 = pneg %p441
      %p665 = pneg %p438
      %p666 = pneg %p462
      %p667 = pneg %p459
      %p668 = scmp.lt.s32.totalorder %s29, 2
      %s669 = scalar_select %p668, %s29, 2
      %s670 = scalar_lea.vmem %s4, %s669
      %p671 = scmp.lt.s32.totalorder %s29, 2
      %s672 = scalar_select %p671, %s29, 2
      %s673 = scalar_lea.vmem %s5, %s672
      %p674 = scmp.lt.s32.totalorder %s29, 2
      %s675 = scalar_select %p674, %s29, 2
      %s676 = smul.addr %s675, 16
      %s677 = smul.addr %s676, 8
      %s678 = scalar_lea.vmem %s6, %s677
      %p679 = scmp.lt.s32.totalorder %s29, 2
      %s680 = scalar_select %p679, %s29, 2
      %s681 = smul.addr %s680, 16
      %s682 = smul.addr %s681, 8
      %s683 = scalar_lea.vmem %s7, %s682
      %p684 = scmp.lt.s32.totalorder %s29, 2
      %s685 = scalar_select %p684, %s29, 2
      %s686 = smul.addr %s685, 16
      %s687 = smul.addr %s686, 8
      %s688 = scalar_lea.vmem %s8, %s687
      %p689 = scmp.lt.s32.totalorder %s29, 2
      %s690 = scalar_select %p689, %s29, 2
      %s691 = scalar_lea.vmem %s9, %s690
      %p692 = scmp.lt.s32.totalorder %s29, 2
      %s693 = scalar_select %p692, %s29, 2
      %s694 = smul.addr %s693, 16
      %s695 = smul.addr %s694, 8
      %s696 = scalar_lea.vmem %s10, %s695
      %p697 = scmp.lt.s32.totalorder %s29, 2
      %s698 = scalar_select %p697, %s29, 2
      %s699 = scalar_lea.vmem %s11, %s698
      %p700 = scmp.lt.s32.totalorder %s29, 2
      %s701 = scalar_select %p700, %s29, 2
      %s702 = smul.addr %s701, 16
      %s703 = smul.addr %s702, 8
      %s704 = scalar_lea.vmem %s12, %s703
      %p705 = scmp.lt.s32.totalorder %s29, 2
      %s706 = scalar_select %p705, %s29, 2
      %s707 = scalar_lea.vmem %s13, %s706
      %p708 = scmp.lt.s32.totalorder %s29, 2
      %s709 = scalar_select %p708, %s29, 2
      %s710 = smul.addr %s709, 16
      %s711 = smul.addr %s710, 8
      %s712 = scalar_lea.vmem %s14, %s711
      %p713 = scmp.lt.s32.totalorder %s29, 2
      %s714 = scalar_select %p713, %s29, 2
      %s715 = scalar_lea.vmem %s15, %s714
      %p716 = scmp.eq.s32.totalorder %s29, 0
      // Predicated region
      $region85: #{flownet_forward.1} parent=83 // pred_check
        %p717 = pneg %p716
      $region86: #{flownet_forward.1} parent=83 // pred_check_branch
        %719 = sbr.rel (%p717) target = $region88
      $region87: #{flownet_forward.1} parent=83 // pred_region
        %v720 = vld [vmem:[%s2] sm:$0xff]
        %v721 = vld [vmem:[%s2 + $0x8] sm:$0xff]
        %v722 = vld [vmem:[%s2 + $0x10] sm:$0xff]
        %v723 = vld [vmem:[%s2 + $0x18] sm:$0xff]
        %724 = vst [vmem:[#allocation2] sm:$0xff] %v720
        %725 = vst [vmem:[#allocation2 + $0x8] sm:$0xff] %v721
        %726 = vst [vmem:[#allocation2 + $0x10] sm:$0xff] %v722
        %727 = vst [vmem:[#allocation2 + $0x18] sm:$0xff] %v723
        %vm728 = vcmask 7168
        %729 = vst.msk [vmem:[#allocation3] sm:$0xff] %vm728, 0.0
      $region88: #{flownet_forward.1} parent=83 // pred_fallthru
        _
      %v730 = vld [vmem:[#allocation2] sm:$0xff]
      %v731 = vld [vmem:[#allocation2 + $0x8] sm:$0xff]
      %v732 = vld [vmem:[#allocation2 + $0x10] sm:$0xff]
      %v733 = vld [vmem:[#allocation2 + $0x18] sm:$0xff]
      %v734 = vld [vmem:[%s670] sm:$0x1]
      %v736 = vlaneseq
      %v737 = vshrl.u32 %v736, 7
      %v738 = vsub.s32 0, %v737
      %v739 = vrot.slane %v734, %v738
      %v741 = vadd.f32 %v730, %v739
      %v742 = vadd.f32 %v731, %v739
      %v743 = vadd.f32 %v732, %v739
      %v744 = vadd.f32 %v733, %v739
      %v745 = vld [vmem:[%s673] sm:$0x1]
      %v747 = vlaneseq
      %v748 = vshrl.u32 %v747, 7
      %v749 = vsub.s32 0, %v748
      %v750 = vrot.slane %v745, %v749
      %v752 = vmul.f32 %v741, %v750
      %v753 = vmul.f32 %v742, %v750
      %v754 = vmul.f32 %v743, %v750
      %v755 = vmul.f32 %v744, %v750
      %v756 = vld [vmem:[%s678] sm:$0xff]
      %v757 = vld [vmem:[%s678 + $0x8] sm:$0xff]
      %v758 = vld [vmem:[%s678 + $0x10] sm:$0xff]
      %v759 = vld [vmem:[%s678 + $0x18] sm:$0xff]
      %v760 = vld [vmem:[%s678 + $0x20] sm:$0xff]
      %v761 = vld [vmem:[%s678 + $0x28] sm:$0xff]
      %v762 = vld [vmem:[%s678 + $0x30] sm:$0xff]
      %v763 = vld [vmem:[%s678 + $0x38] sm:$0xff]
      %v764 = vld [vmem:[%s678 + $0x40] sm:$0xff]
      %v765 = vld [vmem:[%s678 + $0x48] sm:$0xff]
      %v766 = vld [vmem:[%s678 + $0x50] sm:$0xff]
      %v767 = vld [vmem:[%s678 + $0x58] sm:$0xff]
      %v768 = vld [vmem:[%s678 + $0x60] sm:$0xff]
      %v769 = vld [vmem:[%s678 + $0x68] sm:$0xff]
      %v770 = vld [vmem:[%s678 + $0x70] sm:$0xff]
      %v771 = vld [vmem:[%s678 + $0x78] sm:$0xff]
      %772 = vmatprep.subr.mxu0 0.0
      %773 = vmatpush1.msra.mxu0 %v756
      %774 = vmatprep.subr.mxu0 0.0
      %775 = vmatpush1.msra.mxu0 %v757
      %776 = vmatprep.subr.mxu0 0.0
      %777 = vmatpush1.msra.mxu0 %v758
      %778 = vmatprep.subr.mxu0 0.0
      %779 = vmatpush1.msra.mxu0 %v759
      %780 = vmatprep.subr.mxu0 0.0
      %781 = vmatpush1.msra.mxu0 %v760
      %782 = vmatprep.subr.mxu0 0.0
      %783 = vmatpush1.msra.mxu0 %v761
      %784 = vmatprep.subr.mxu0 0.0
      %785 = vmatpush1.msra.mxu0 %v762
      %786 = vmatprep.subr.mxu0 0.0
      %787 = vmatpush1.msra.mxu0 %v763
      %788 = vmatprep.subr.mxu0 0.0
      %789 = vmatpush1.msra.mxu0 %v764
      %790 = vmatprep.subr.mxu0 0.0
      %791 = vmatpush1.msra.mxu0 %v765
      %792 = vmatprep.subr.mxu0 0.0
      %793 = vmatpush1.msra.mxu0 %v766
      %794 = vmatprep.subr.mxu0 0.0
      %795 = vmatpush1.msra.mxu0 %v767
      %796 = vmatprep.subr.mxu0 0.0
      %797 = vmatpush1.msra.mxu0 %v768
      %798 = vmatprep.subr.mxu0 0.0
      %799 = vmatpush1.msra.mxu0 %v769
      %800 = vmatprep.subr.mxu0 0.0
      %801 = vmatpush1.msra.mxu0 %v770
      %802 = vmatprep.subr.mxu0 0.0
      %803 = vmatpush1.msra.mxu0 %v771
      %804 = vmatprep.subr.mxu0 0.0
      %805 = vmatpush1.msra.mxu0 0.0
      %806 = vmatprep.subr.mxu0 0.0
      %807 = vmatpush1.msra.mxu0 0.0
      %808 = vmatprep.subr.mxu0 0.0
      %809 = vmatpush1.msra.mxu0 0.0
      %810 = vmatprep.subr.mxu0 0.0
      %811 = vmatpush1.msra.mxu0 0.0
      %812 = vmatprep.subr.mxu0 0.0
      %813 = vmatpush1.msra.mxu0 0.0
      %814 = vmatprep.subr.mxu0 0.0
      %815 = vmatpush1.msra.mxu0 0.0
      %816 = vmatprep.subr.mxu0 0.0
      %817 = vmatpush1.msra.mxu0 0.0
      %818 = vmatprep.subr.mxu0 0.0
      %819 = vmatpush1.msra.mxu0 0.0
      %820 = vmatprep.subr.mxu0 0.0
      %821 = vmatpush1.msra.mxu0 0.0
      %822 = vmatprep.subr.mxu0 0.0
      %823 = vmatpush1.msra.mxu0 0.0
      %824 = vmatprep.subr.mxu0 0.0
      %825 = vmatpush1.msra.mxu0 0.0
      %826 = vmatprep.subr.mxu0 0.0
      %827 = vmatpush1.msra.mxu0 0.0
      %828 = vmatprep.subr.mxu0 0.0
      %829 = vmatpush1.msra.mxu0 0.0
      %830 = vmatprep.subr.mxu0 0.0
      %831 = vmatpush1.msra.mxu0 0.0
      %832 = vmatprep.subr.mxu0 0.0
      %833 = vmatpush1.msra.mxu0 0.0
      %834 = vmatprep.subr.mxu0 0.0
      %835 = vmatpush1.msra.mxu0 0.0
      %836 = vmatprep.mubr.f32.mxu0 0.0
      %837 = vmatmul.mubr.f32.gmra.mrb[0].mxu0 %v752
      %v838 = vpop.f32.mrb[0].mxu0
      %v839 = vadd.f32 0.0, %v838
      %v840 = vpop.f32.mrb[0].mxu0
      %841 = vmatprep.mubr.f32.mxu0 0.0
      %842 = vmatmul.mubr.f32.gmra.mrb[0].mxu0 %v753
      %v843 = vpop.f32.mrb[0].mxu0
      %v844 = vadd.f32 0.0, %v843
      %v845 = vpop.f32.mrb[0].mxu0
      %846 = vmatprep.mubr.f32.mxu0 0.0
      %847 = vmatmul.mubr.f32.gmra.mrb[0].mxu0 %v754
      %v848 = vpop.f32.mrb[0].mxu0
      %v849 = vadd.f32 0.0, %v848
      %v850 = vpop.f32.mrb[0].mxu0
      %851 = vmatprep.mubr.f32.mxu0 0.0
      %852 = vmatmul.mubr.f32.gmra.mrb[0].mxu0 %v755
      %v853 = vpop.f32.mrb[0].mxu0
      %v854 = vadd.f32 0.0, %v853
      %v855 = vpop.f32.mrb[0].mxu0
      %856 = vdwg.mxu0
      %v857 = vld [vmem:[%s3] sm:$0xff]
      %v858 = vld [vmem:[%s3 + $0x8] sm:$0xff]
      %v859 = vld [vmem:[%s3 + $0x10] sm:$0xff]
      %v860 = vld [vmem:[%s3 + $0x18] sm:$0xff]
      %v861 = vld [vmem:[%s683] sm:$0xff]
      %v862 = vld [vmem:[%s683 + $0x8] sm:$0xff]
      %v863 = vld [vmem:[%s683 + $0x10] sm:$0xff]
      %v864 = vld [vmem:[%s683 + $0x18] sm:$0xff]
      %v865 = vld [vmem:[%s683 + $0x20] sm:$0xff]
      %v866 = vld [vmem:[%s683 + $0x28] sm:$0xff]
      %v867 = vld [vmem:[%s683 + $0x30] sm:$0xff]
      %v868 = vld [vmem:[%s683 + $0x38] sm:$0xff]
      %v869 = vld [vmem:[%s683 + $0x40] sm:$0xff]
      %v870 = vld [vmem:[%s683 + $0x48] sm:$0xff]
      %v871 = vld [vmem:[%s683 + $0x50] sm:$0xff]
      %v872 = vld [vmem:[%s683 + $0x58] sm:$0xff]
      %v873 = vld [vmem:[%s683 + $0x60] sm:$0xff]
      %v874 = vld [vmem:[%s683 + $0x68] sm:$0xff]
      %v875 = vld [vmem:[%s683 + $0x70] sm:$0xff]
      %v876 = vld [vmem:[%s683 + $0x78] sm:$0xff]
      %v877 = vld [vmem:[%s688] sm:$0xff]
      %v878 = vld [vmem:[%s688 + $0x8] sm:$0xff]
      %v879 = vld [vmem:[%s688 + $0x10] sm:$0xff]
      %v880 = vld [vmem:[%s688 + $0x18] sm:$0xff]
      %v881 = vld [vmem:[%s688 + $0x20] sm:$0xff]
      %v882 = vld [vmem:[%s688 + $0x28] sm:$0xff]
      %v883 = vld [vmem:[%s688 + $0x30] sm:$0xff]
      %v884 = vld [vmem:[%s688 + $0x38] sm:$0xff]
      %v885 = vld [vmem:[%s688 + $0x40] sm:$0xff]
      %v886 = vld [vmem:[%s688 + $0x48] sm:$0xff]
      %v887 = vld [vmem:[%s688 + $0x50] sm:$0xff]
      %v888 = vld [vmem:[%s688 + $0x58] sm:$0xff]
      %v889 = vld [vmem:[%s688 + $0x60] sm:$0xff]
      %v890 = vld [vmem:[%s688 + $0x68] sm:$0xff]
      %v891 = vld [vmem:[%s688 + $0x70] sm:$0xff]
      %v892 = vld [vmem:[%s688 + $0x78] sm:$0xff]
      %893 = vmatprep.subr.mxu0 0.0
      %894 = vmatpush1.msra.mxu0 %v877
      %895 = vmatprep.subr.mxu0 0.0
      %896 = vmatpush1.msra.mxu0 %v878
      %897 = vmatprep.subr.mxu0 0.0
      %898 = vmatpush1.msra.mxu0 %v879
      %899 = vmatprep.subr.mxu0 0.0
      %900 = vmatpush1.msra.mxu0 %v880
      %901 = vmatprep.subr.mxu0 0.0
      %902 = vmatpush1.msra.mxu0 %v881
      %903 = vmatprep.subr.mxu0 0.0
      %904 = vmatpush1.msra.mxu0 %v882
      %905 = vmatprep.subr.mxu0 0.0
      %906 = vmatpush1.msra.mxu0 %v883
      %907 = vmatprep.subr.mxu0 0.0
      %908 = vmatpush1.msra.mxu0 %v884
      %909 = vmatprep.subr.mxu0 0.0
      %910 = vmatpush1.msra.mxu0 %v885
      %911 = vmatprep.subr.mxu0 0.0
      %912 = vmatpush1.msra.mxu0 %v886
      %913 = vmatprep.subr.mxu0 0.0
      %914 = vmatpush1.msra.mxu0 %v887
      %915 = vmatprep.subr.mxu0 0.0
      %916 = vmatpush1.msra.mxu0 %v888
      %917 = vmatprep.subr.mxu0 0.0
      %918 = vmatpush1.msra.mxu0 %v889
      %919 = vmatprep.subr.mxu0 0.0
      %920 = vmatpush1.msra.mxu0 %v890
      %921 = vmatprep.subr.mxu0 0.0
      %922 = vmatpush1.msra.mxu0 %v891
      %923 = vmatprep.subr.mxu0 0.0
      %924 = vmatpush1.msra.mxu0 %v892
      %925 = vmatprep.subr.mxu0 0.0
      %926 = vmatpush1.msra.mxu0 0.0
      %927 = vmatprep.subr.mxu0 0.0
      %928 = vmatpush1.msra.mxu0 0.0
      %929 = vmatprep.subr.mxu0 0.0
      %930 = vmatpush1.msra.mxu0 0.0
      %931 = vmatprep.subr.mxu0 0.0
      %932 = vmatpush1.msra.mxu0 0.0
      %933 = vmatprep.subr.mxu0 0.0
      %934 = vmatpush1.msra.mxu0 0.0
      %935 = vmatprep.subr.mxu0 0.0
      %936 = vmatpush1.msra.mxu0 0.0
      %937 = vmatprep.subr.mxu0 0.0
      %938 = vmatpush1.msra.mxu0 0.0
      %939 = vmatprep.subr.mxu0 0.0
      %940 = vmatpush1.msra.mxu0 0.0
      %941 = vmatprep.subr.mxu0 0.0
      %942 = vmatpush1.msra.mxu0 0.0
      %943 = vmatprep.subr.mxu0 0.0
      %944 = vmatpush1.msra.mxu0 0.0
      %945 = vmatprep.subr.mxu0 0.0
      %946 = vmatpush1.msra.mxu0 0.0
      %947 = vmatprep.subr.mxu0 0.0
      %948 = vmatpush1.msra.mxu0 0.0
      %949 = vmatprep.subr.mxu0 0.0
      %950 = vmatpush1.msra.mxu0 0.0
      %951 = vmatprep.subr.mxu0 0.0
      %952 = vmatpush1.msra.mxu0 0.0
      %953 = vmatprep.subr.mxu0 0.0
      %954 = vmatpush1.msra.mxu0 0.0
      %955 = vmatprep.subr.mxu0 0.0
      %956 = vmatpush1.msra.mxu0 0.0
      %957 = vmatprep.mubr.f32.mxu0 0.0
      %958 = vmatmul.mubr.f32.gmra.mrb[0].mxu0 %v857
      %v959 = vpop.f32.mrb[0].mxu0
      %v960 = vadd.f32 0.0, %v959
      %v961 = vpop.f32.mrb[0].mxu0
      %962 = vmatprep.mubr.f32.mxu0 0.0
      %963 = vmatmul.mubr.f32.gmra.mrb[0].mxu0 %v858
      %v964 = vpop.f32.mrb[0].mxu0
      %v965 = vadd.f32 0.0, %v964
      %v966 = vpop.f32.mrb[0].mxu0
      %967 = vmatprep.mubr.f32.mxu0 0.0
      %968 = vmatmul.mubr.f32.gmra.mrb[0].mxu0 %v859
      %v969 = vpop.f32.mrb[0].mxu0
      %v970 = vadd.f32 0.0, %v969
      %v971 = vpop.f32.mrb[0].mxu0
      %972 = vmatprep.mubr.f32.mxu0 0.0
      %973 = vmatmul.mubr.f32.gmra.mrb[0].mxu0 %v860
      %v974 = vpop.f32.mrb[0].mxu0
      %v975 = vadd.f32 0.0, %v974
      %v976 = vpop.f32.mrb[0].mxu0
      %977 = vdwg.mxu0
      %978 = vmatprep.subr.mxu0 0.0
      %979 = vmatpush1.msra.mxu0 %v861
      %980 = vmatprep.subr.mxu0 0.0
      %981 = vmatpush1.msra.mxu0 %v862
      %982 = vmatprep.subr.mxu0 0.0
      %983 = vmatpush1.msra.mxu0 %v863
      %984 = vmatprep.subr.mxu0 0.0
      %985 = vmatpush1.msra.mxu0 %v864
      %986 = vmatprep.subr.mxu0 0.0
      %987 = vmatpush1.msra.mxu0 %v865
      %988 = vmatprep.subr.mxu0 0.0
      %989 = vmatpush1.msra.mxu0 %v866
      %990 = vmatprep.subr.mxu0 0.0
      %991 = vmatpush1.msra.mxu0 %v867
      %992 = vmatprep.subr.mxu0 0.0
      %993 = vmatpush1.msra.mxu0 %v868
      %994 = vmatprep.subr.mxu0 0.0
      %995 = vmatpush1.msra.mxu0 %v869
      %996 = vmatprep.subr.mxu0 0.0
      %997 = vmatpush1.msra.mxu0 %v870
      %998 = vmatprep.subr.mxu0 0.0
      %999 = vmatpush1.msra.mxu0 %v871
      %1000 = vmatprep.subr.mxu0 0.0
      %1001 = vmatpush1.msra.mxu0 %v872
      %1002 = vmatprep.subr.mxu0 0.0
      %1003 = vmatpush1.msra.mxu0 %v873
      %1004 = vmatprep.subr.mxu0 0.0
      %1005 = vmatpush1.msra.mxu0 %v874
      %1006 = vmatprep.subr.mxu0 0.0
      %1007 = vmatpush1.msra.mxu0 %v875
      %1008 = vmatprep.subr.mxu0 0.0
      %1009 = vmatpush1.msra.mxu0 %v876
      %1010 = vmatprep.subr.mxu0 0.0
      %1011 = vmatpush1.msra.mxu0 0.0
      %1012 = vmatprep.subr.mxu0 0.0
      %1013 = vmatpush1.msra.mxu0 0.0
      %1014 = vmatprep.subr.mxu0 0.0
      %1015 = vmatpush1.msra.mxu0 0.0
      %1016 = vmatprep.subr.mxu0 0.0
      %1017 = vmatpush1.msra.mxu0 0.0
      %1018 = vmatprep.subr.mxu0 0.0
      %1019 = vmatpush1.msra.mxu0 0.0
      %1020 = vmatprep.subr.mxu0 0.0
      %1021 = vmatpush1.msra.mxu0 0.0
      %1022 = vmatprep.subr.mxu0 0.0
      %1023 = vmatpush1.msra.mxu0 0.0
      %1024 = vmatprep.subr.mxu0 0.0
      %1025 = vmatpush1.msra.mxu0 0.0
      %1026 = vmatprep.subr.mxu0 0.0
      %1027 = vmatpush1.msra.mxu0 0.0
      %1028 = vmatprep.subr.mxu0 0.0
      %1029 = vmatpush1.msra.mxu0 0.0
      %1030 = vmatprep.subr.mxu0 0.0
      %1031 = vmatpush1.msra.mxu0 0.0
      %1032 = vmatprep.subr.mxu0 0.0
      %1033 = vmatpush1.msra.mxu0 0.0
      %1034 = vmatprep.subr.mxu0 0.0
      %1035 = vmatpush1.msra.mxu0 0.0
      %1036 = vmatprep.subr.mxu0 0.0
      %1037 = vmatpush1.msra.mxu0 0.0
      %1038 = vmatprep.subr.mxu0 0.0
      %1039 = vmatpush1.msra.mxu0 0.0
      %1040 = vmatprep.subr.mxu0 0.0
      %1041 = vmatpush1.msra.mxu0 0.0
      %1042 = vmatprep.mubr.f32.mxu0 0.0
      %1043 = vmatmul.mubr.f32.gmra.mrb[0].mxu0 %v839
      %v1044 = vpop.f32.mrb[0].mxu0
      %v1045 = vadd.f32 %v960, %v1044
      %v1046 = vpop.f32.mrb[0].mxu0
      %1047 = vmatprep.mubr.f32.mxu0 0.0
      %1048 = vmatmul.mubr.f32.gmra.mrb[0].mxu0 %v844
      %v1049 = vpop.f32.mrb[0].mxu0
      %v1050 = vadd.f32 %v965, %v1049
      %v1051 = vpop.f32.mrb[0].mxu0
      %1052 = vmatprep.mubr.f32.mxu0 0.0
      %1053 = vmatmul.mubr.f32.gmra.mrb[0].mxu0 %v849
      %v1054 = vpop.f32.mrb[0].mxu0
      %v1055 = vadd.f32 %v970, %v1054
      %v1056 = vpop.f32.mrb[0].mxu0
      %1057 = vmatprep.mubr.f32.mxu0 0.0
      %1058 = vmatmul.mubr.f32.gmra.mrb[0].mxu0 %v854
      %v1059 = vpop.f32.mrb[0].mxu0
      %v1060 = vadd.f32 %v975, %v1059
      %v1061 = vpop.f32.mrb[0].mxu0
      %1062 = vdwg.mxu0
      %v1063 = vld [vmem:[%s691] sm:$0x1]
      %v1065 = vlaneseq
      %v1066 = vshrl.u32 %v1065, 7
      %v1067 = vsub.s32 0, %v1066
      %v1068 = vrot.slane %v1063, %v1067
      %v1070 = vadd.f32 %v1045, %v1068
      %v1071 = vadd.f32 %v1050, %v1068
      %v1072 = vadd.f32 %v1055, %v1068
      %v1073 = vadd.f32 %v1060, %v1068
      %v1074 = vmax.f32 %v1070, 0.0
      %v1075 = vmax.f32 %v1071, 0.0
      %v1076 = vmax.f32 %v1072, 0.0
      %v1077 = vmax.f32 %v1073, 0.0
      %v1078 = vld [vmem:[%s696] sm:$0xff]
      %v1079 = vld [vmem:[%s696 + $0x8] sm:$0xff]
      %v1080 = vld [vmem:[%s696 + $0x10] sm:$0xff]
      %v1081 = vld [vmem:[%s696 + $0x18] sm:$0xff]
      %v1082 = vld [vmem:[%s696 + $0x20] sm:$0xff]
      %v1083 = vld [vmem:[%s696 + $0x28] sm:$0xff]
      %v1084 = vld [vmem:[%s696 + $0x30] sm:$0xff]
      %v1085 = vld [vmem:[%s696 + $0x38] sm:$0xff]
      %v1086 = vld [vmem:[%s696 + $0x40] sm:$0xff]
      %v1087 = vld [vmem:[%s696 + $0x48] sm:$0xff]
      %v1088 = vld [vmem:[%s696 + $0x50] sm:$0xff]
      %v1089 = vld [vmem:[%s696 + $0x58] sm:$0xff]
      %v1090 = vld [vmem:[%s696 + $0x60] sm:$0xff]
      %v1091 = vld [vmem:[%s696 + $0x68] sm:$0xff]
      %v1092 = vld [vmem:[%s696 + $0x70] sm:$0xff]
      %v1093 = vld [vmem:[%s696 + $0x78] sm:$0xff]
      %v1094 = vld [vmem:[%s699] sm:$0x1]
      %v1096 = vlaneseq
      %v1097 = vshrl.u32 %v1096, 7
      %v1098 = vsub.s32 0, %v1097
      %v1099 = vrot.slane %v1094, %v1098
      %1101 = vmatprep.subr.mxu0 0.0
      %1102 = vmatpush1.msra.mxu0 %v1078
      %1103 = vmatprep.subr.mxu0 0.0
      %1104 = vmatpush1.msra.mxu0 %v1079
      %1105 = vmatprep.subr.mxu0 0.0
      %1106 = vmatpush1.msra.mxu0 %v1080
      %1107 = vmatprep.subr.mxu0 0.0
      %1108 = vmatpush1.msra.mxu0 %v1081
      %1109 = vmatprep.subr.mxu0 0.0
      %1110 = vmatpush1.msra.mxu0 %v1082
      %1111 = vmatprep.subr.mxu0 0.0
      %1112 = vmatpush1.msra.mxu0 %v1083
      %1113 = vmatprep.subr.mxu0 0.0
      %1114 = vmatpush1.msra.mxu0 %v1084
      %1115 = vmatprep.subr.mxu0 0.0
      %1116 = vmatpush1.msra.mxu0 %v1085
      %1117 = vmatprep.subr.mxu0 0.0
      %1118 = vmatpush1.msra.mxu0 %v1086
      %1119 = vmatprep.subr.mxu0 0.0
      %1120 = vmatpush1.msra.mxu0 %v1087
      %1121 = vmatprep.subr.mxu0 0.0
      %1122 = vmatpush1.msra.mxu0 %v1088
      %1123 = vmatprep.subr.mxu0 0.0
      %1124 = vmatpush1.msra.mxu0 %v1089
      %1125 = vmatprep.subr.mxu0 0.0
      %1126 = vmatpush1.msra.mxu0 %v1090
      %1127 = vmatprep.subr.mxu0 0.0
      %1128 = vmatpush1.msra.mxu0 %v1091
      %1129 = vmatprep.subr.mxu0 0.0
      %1130 = vmatpush1.msra.mxu0 %v1092
      %1131 = vmatprep.subr.mxu0 0.0
      %1132 = vmatpush1.msra.mxu0 %v1093
      %1133 = vmatprep.subr.mxu0 0.0
      %1134 = vmatpush1.msra.mxu0 0.0
      %1135 = vmatprep.subr.mxu0 0.0
      %1136 = vmatpush1.msra.mxu0 0.0
      %1137 = vmatprep.subr.mxu0 0.0
      %1138 = vmatpush1.msra.mxu0 0.0
      %1139 = vmatprep.subr.mxu0 0.0
      %1140 = vmatpush1.msra.mxu0 0.0
      %1141 = vmatprep.subr.mxu0 0.0
      %1142 = vmatpush1.msra.mxu0 0.0
      %1143 = vmatprep.subr.mxu0 0.0
      %1144 = vmatpush1.msra.mxu0 0.0
      %1145 = vmatprep.subr.mxu0 0.0
      %1146 = vmatpush1.msra.mxu0 0.0
      %1147 = vmatprep.subr.mxu0 0.0
      %1148 = vmatpush1.msra.mxu0 0.0
      %1149 = vmatprep.subr.mxu0 0.0
      %1150 = vmatpush1.msra.mxu0 0.0
      %1151 = vmatprep.subr.mxu0 0.0
      %1152 = vmatpush1.msra.mxu0 0.0
      %1153 = vmatprep.subr.mxu0 0.0
      %1154 = vmatpush1.msra.mxu0 0.0
      %1155 = vmatprep.subr.mxu0 0.0
      %1156 = vmatpush1.msra.mxu0 0.0
      %1157 = vmatprep.subr.mxu0 0.0
      %1158 = vmatpush1.msra.mxu0 0.0
      %1159 = vmatprep.subr.mxu0 0.0
      %1160 = vmatpush1.msra.mxu0 0.0
      %1161 = vmatprep.subr.mxu0 0.0
      %1162 = vmatpush1.msra.mxu0 0.0
      %1163 = vmatprep.subr.mxu0 0.0
      %1164 = vmatpush1.msra.mxu0 0.0
      %1165 = vmatprep.mubr.f32.mxu0 0.0
      %1166 = vmatmul.mubr.f32.gmra.mrb[0].mxu0 %v1074
      %v1167 = vpop.f32.mrb[0].mxu0
      %v1168 = vadd.f32 %v1099, %v1167
      %v1169 = vpop.f32.mrb[0].mxu0
      %1170 = vmatprep.mubr.f32.mxu0 0.0
      %1171 = vmatmul.mubr.f32.gmra.mrb[0].mxu0 %v1075
      %v1172 = vpop.f32.mrb[0].mxu0
      %v1173 = vadd.f32 %v1099, %v1172
      %v1174 = vpop.f32.mrb[0].mxu0
      %1175 = vmatprep.mubr.f32.mxu0 0.0
      %1176 = vmatmul.mubr.f32.gmra.mrb[0].mxu0 %v1076
      %v1177 = vpop.f32.mrb[0].mxu0
      %v1178 = vadd.f32 %v1099, %v1177
      %v1179 = vpop.f32.mrb[0].mxu0
      %1180 = vmatprep.mubr.f32.mxu0 0.0
      %1181 = vmatmul.mubr.f32.gmra.mrb[0].mxu0 %v1077
      %v1182 = vpop.f32.mrb[0].mxu0
      %v1183 = vadd.f32 %v1099, %v1182
      %v1184 = vpop.f32.mrb[0].mxu0
      %1185 = vdwg.mxu0
      %v1186 = vmax.f32 %v1168, 0.0
      %v1187 = vmax.f32 %v1173, 0.0
      %v1188 = vmax.f32 %v1178, 0.0
      %v1189 = vmax.f32 %v1183, 0.0
      %v1190 = vld [vmem:[%s704] sm:$0xff]
      %v1191 = vld [vmem:[%s704 + $0x8] sm:$0xff]
      %v1192 = vld [vmem:[%s704 + $0x10] sm:$0xff]
      %v1193 = vld [vmem:[%s704 + $0x18] sm:$0xff]
      %v1194 = vld [vmem:[%s704 + $0x20] sm:$0xff]
      %v1195 = vld [vmem:[%s704 + $0x28] sm:$0xff]
      %v1196 = vld [vmem:[%s704 + $0x30] sm:$0xff]
      %v1197 = vld [vmem:[%s704 + $0x38] sm:$0xff]
      %v1198 = vld [vmem:[%s704 + $0x40] sm:$0xff]
      %v1199 = vld [vmem:[%s704 + $0x48] sm:$0xff]
      %v1200 = vld [vmem:[%s704 + $0x50] sm:$0xff]
      %v1201 = vld [vmem:[%s704 + $0x58] sm:$0xff]
      %v1202 = vld [vmem:[%s704 + $0x60] sm:$0xff]
      %v1203 = vld [vmem:[%s704 + $0x68] sm:$0xff]
      %v1204 = vld [vmem:[%s704 + $0x70] sm:$0xff]
      %v1205 = vld [vmem:[%s704 + $0x78] sm:$0xff]
      %v1206 = vld [vmem:[%s707] sm:$0x1]
      %v1208 = vlaneseq
      %v1209 = vshrl.u32 %v1208, 7
      %v1210 = vsub.s32 0, %v1209
      %v1211 = vrot.slane %v1206, %v1210
      %1213 = vmatprep.subr.mxu0 0.0
      %1214 = vmatpush1.msra.mxu0 %v1190
      %1215 = vmatprep.subr.mxu0 0.0
      %1216 = vmatpush1.msra.mxu0 %v1191
      %1217 = vmatprep.subr.mxu0 0.0
      %1218 = vmatpush1.msra.mxu0 %v1192
      %1219 = vmatprep.subr.mxu0 0.0
      %1220 = vmatpush1.msra.mxu0 %v1193
      %1221 = vmatprep.subr.mxu0 0.0
      %1222 = vmatpush1.msra.mxu0 %v1194
      %1223 = vmatprep.subr.mxu0 0.0
      %1224 = vmatpush1.msra.mxu0 %v1195
      %1225 = vmatprep.subr.mxu0 0.0
      %1226 = vmatpush1.msra.mxu0 %v1196
      %1227 = vmatprep.subr.mxu0 0.0
      %1228 = vmatpush1.msra.mxu0 %v1197
      %1229 = vmatprep.subr.mxu0 0.0
      %1230 = vmatpush1.msra.mxu0 %v1198
      %1231 = vmatprep.subr.mxu0 0.0
      %1232 = vmatpush1.msra.mxu0 %v1199
      %1233 = vmatprep.subr.mxu0 0.0
      %1234 = vmatpush1.msra.mxu0 %v1200
      %1235 = vmatprep.subr.mxu0 0.0
      %1236 = vmatpush1.msra.mxu0 %v1201
      %1237 = vmatprep.subr.mxu0 0.0
      %1238 = vmatpush1.msra.mxu0 %v1202
      %1239 = vmatprep.subr.mxu0 0.0
      %1240 = vmatpush1.msra.mxu0 %v1203
      %1241 = vmatprep.subr.mxu0 0.0
      %1242 = vmatpush1.msra.mxu0 %v1204
      %1243 = vmatprep.subr.mxu0 0.0
      %1244 = vmatpush1.msra.mxu0 %v1205
      %1245 = vmatprep.subr.mxu0 0.0
      %1246 = vmatpush1.msra.mxu0 0.0
      %1247 = vmatprep.subr.mxu0 0.0
      %1248 = vmatpush1.msra.mxu0 0.0
      %1249 = vmatprep.subr.mxu0 0.0
      %1250 = vmatpush1.msra.mxu0 0.0
      %1251 = vmatprep.subr.mxu0 0.0
      %1252 = vmatpush1.msra.mxu0 0.0
      %1253 = vmatprep.subr.mxu0 0.0
      %1254 = vmatpush1.msra.mxu0 0.0
      %1255 = vmatprep.subr.mxu0 0.0
      %1256 = vmatpush1.msra.mxu0 0.0
      %1257 = vmatprep.subr.mxu0 0.0
      %1258 = vmatpush1.msra.mxu0 0.0
      %1259 = vmatprep.subr.mxu0 0.0
      %1260 = vmatpush1.msra.mxu0 0.0
      %1261 = vmatprep.subr.mxu0 0.0
      %1262 = vmatpush1.msra.mxu0 0.0
      %1263 = vmatprep.subr.mxu0 0.0
      %1264 = vmatpush1.msra.mxu0 0.0
      %1265 = vmatprep.subr.mxu0 0.0
      %1266 = vmatpush1.msra.mxu0 0.0
      %1267 = vmatprep.subr.mxu0 0.0
      %1268 = vmatpush1.msra.mxu0 0.0
      %1269 = vmatprep.subr.mxu0 0.0
      %1270 = vmatpush1.msra.mxu0 0.0
      %1271 = vmatprep.subr.mxu0 0.0
      %1272 = vmatpush1.msra.mxu0 0.0
      %1273 = vmatprep.subr.mxu0 0.0
      %1274 = vmatpush1.msra.mxu0 0.0
      %1275 = vmatprep.subr.mxu0 0.0
      %1276 = vmatpush1.msra.mxu0 0.0
      %1277 = vmatprep.mubr.f32.mxu0 0.0
      %1278 = vmatmul.mubr.f32.gmra.mrb[0].mxu0 %v1186
      %v1279 = vpop.f32.mrb[0].mxu0
      %v1280 = vadd.f32 %v1211, %v1279
      %v1281 = vpop.f32.mrb[0].mxu0
      %1282 = vmatprep.mubr.f32.mxu0 0.0
      %1283 = vmatmul.mubr.f32.gmra.mrb[0].mxu0 %v1187
      %v1284 = vpop.f32.mrb[0].mxu0
      %v1285 = vadd.f32 %v1211, %v1284
      %v1286 = vpop.f32.mrb[0].mxu0
      %1287 = vmatprep.mubr.f32.mxu0 0.0
      %1288 = vmatmul.mubr.f32.gmra.mrb[0].mxu0 %v1188
      %v1289 = vpop.f32.mrb[0].mxu0
      %v1290 = vadd.f32 %v1211, %v1289
      %v1291 = vpop.f32.mrb[0].mxu0
      %1292 = vmatprep.mubr.f32.mxu0 0.0
      %1293 = vmatmul.mubr.f32.gmra.mrb[0].mxu0 %v1189
      %v1294 = vpop.f32.mrb[0].mxu0
      %v1295 = vadd.f32 %v1211, %v1294
      %v1296 = vpop.f32.mrb[0].mxu0
      %1297 = vdwg.mxu0
      %v1298 = vld [vmem:[%s712] sm:$0xff]
      %v1299 = vld [vmem:[%s712 + $0x8] sm:$0xff]
      %v1300 = vld [vmem:[%s712 + $0x10] sm:$0xff]
      %v1301 = vld [vmem:[%s712 + $0x18] sm:$0xff]
      %v1302 = vld [vmem:[%s712 + $0x20] sm:$0xff]
      %v1303 = vld [vmem:[%s712 + $0x28] sm:$0xff]
      %v1304 = vld [vmem:[%s712 + $0x30] sm:$0xff]
      %v1305 = vld [vmem:[%s712 + $0x38] sm:$0xff]
      %v1306 = vld [vmem:[%s712 + $0x40] sm:$0xff]
      %v1307 = vld [vmem:[%s712 + $0x48] sm:$0xff]
      %v1308 = vld [vmem:[%s712 + $0x50] sm:$0xff]
      %v1309 = vld [vmem:[%s712 + $0x58] sm:$0xff]
      %v1310 = vld [vmem:[%s712 + $0x60] sm:$0xff]
      %v1311 = vld [vmem:[%s712 + $0x68] sm:$0xff]
      %v1312 = vld [vmem:[%s712 + $0x70] sm:$0xff]
      %v1313 = vld [vmem:[%s712 + $0x78] sm:$0xff]
      %v1314 = vld [vmem:[%s715] sm:$0x1]
      %v1316 = vlaneseq
      %v1317 = vshrl.u32 %v1316, 7
      %v1318 = vsub.s32 0, %v1317
      %v1319 = vrot.slane %v1314, %v1318
      %1321 = vmatprep.subr.mxu0 0.0
      %1322 = vmatpush1.msra.mxu0 %v1298
      %1323 = vmatprep.subr.mxu0 0.0
      %1324 = vmatpush1.msra.mxu0 %v1299
      %1325 = vmatprep.subr.mxu0 0.0
      %1326 = vmatpush1.msra.mxu0 %v1300
      %1327 = vmatprep.subr.mxu0 0.0
      %1328 = vmatpush1.msra.mxu0 %v1301
      %1329 = vmatprep.subr.mxu0 0.0
      %1330 = vmatpush1.msra.mxu0 %v1302
      %1331 = vmatprep.subr.mxu0 0.0
      %1332 = vmatpush1.msra.mxu0 %v1303
      %1333 = vmatprep.subr.mxu0 0.0
      %1334 = vmatpush1.msra.mxu0 %v1304
      %1335 = vmatprep.subr.mxu0 0.0
      %1336 = vmatpush1.msra.mxu0 %v1305
      %1337 = vmatprep.subr.mxu0 0.0
      %1338 = vmatpush1.msra.mxu0 %v1306
      %1339 = vmatprep.subr.mxu0 0.0
      %1340 = vmatpush1.msra.mxu0 %v1307
      %1341 = vmatprep.subr.mxu0 0.0
      %1342 = vmatpush1.msra.mxu0 %v1308
      %1343 = vmatprep.subr.mxu0 0.0
      %1344 = vmatpush1.msra.mxu0 %v1309
      %1345 = vmatprep.subr.mxu0 0.0
      %1346 = vmatpush1.msra.mxu0 %v1310
      %1347 = vmatprep.subr.mxu0 0.0
      %1348 = vmatpush1.msra.mxu0 %v1311
      %1349 = vmatprep.subr.mxu0 0.0
      %1350 = vmatpush1.msra.mxu0 %v1312
      %1351 = vmatprep.subr.mxu0 0.0
      %1352 = vmatpush1.msra.mxu0 %v1313
      %1353 = vmatprep.subr.mxu0 0.0
      %1354 = vmatpush1.msra.mxu0 0.0
      %1355 = vmatprep.subr.mxu0 0.0
      %1356 = vmatpush1.msra.mxu0 0.0
      %1357 = vmatprep.subr.mxu0 0.0
      %1358 = vmatpush1.msra.mxu0 0.0
      %1359 = vmatprep.subr.mxu0 0.0
      %1360 = vmatpush1.msra.mxu0 0.0
      %1361 = vmatprep.subr.mxu0 0.0
      %1362 = vmatpush1.msra.mxu0 0.0
      %1363 = vmatprep.subr.mxu0 0.0
      %1364 = vmatpush1.msra.mxu0 0.0
      %1365 = vmatprep.subr.mxu0 0.0
      %1366 = vmatpush1.msra.mxu0 0.0
      %1367 = vmatprep.subr.mxu0 0.0
      %1368 = vmatpush1.msra.mxu0 0.0
      %1369 = vmatprep.subr.mxu0 0.0
      %1370 = vmatpush1.msra.mxu0 0.0
      %1371 = vmatprep.subr.mxu0 0.0
      %1372 = vmatpush1.msra.mxu0 0.0
      %1373 = vmatprep.subr.mxu0 0.0
      %1374 = vmatpush1.msra.mxu0 0.0
      %1375 = vmatprep.subr.mxu0 0.0
      %1376 = vmatpush1.msra.mxu0 0.0
      %1377 = vmatprep.subr.mxu0 0.0
      %1378 = vmatpush1.msra.mxu0 0.0
      %1379 = vmatprep.subr.mxu0 0.0
      %1380 = vmatpush1.msra.mxu0 0.0
      %1381 = vmatprep.subr.mxu0 0.0
      %1382 = vmatpush1.msra.mxu0 0.0
      %1383 = vmatprep.subr.mxu0 0.0
      %1384 = vmatpush1.msra.mxu0 0.0
      %1385 = vmatprep.mubr.f32.mxu0 0.0
      %1386 = vmatmul.mubr.f32.gmra.mrb[0].mxu0 %v1186
      %v1387 = vpop.f32.mrb[0].mxu0
      %v1388 = vadd.f32 %v1319, %v1387
      %v1389 = vpop.f32.mrb[0].mxu0
      %1390 = vmatprep.mubr.f32.mxu0 0.0
      %1391 = vmatmul.mubr.f32.gmra.mrb[0].mxu0 %v1187
      %v1392 = vpop.f32.mrb[0].mxu0
      %v1393 = vadd.f32 %v1319, %v1392
      %v1394 = vpop.f32.mrb[0].mxu0
      %1395 = vmatprep.mubr.f32.mxu0 0.0
      %1396 = vmatmul.mubr.f32.gmra.mrb[0].mxu0 %v1188
      %v1397 = vpop.f32.mrb[0].mxu0
      %v1398 = vadd.f32 %v1319, %v1397
      %v1399 = vpop.f32.mrb[0].mxu0
      %1400 = vmatprep.mubr.f32.mxu0 0.0
      %1401 = vmatmul.mubr.f32.gmra.mrb[0].mxu0 %v1189
      %v1402 = vpop.f32.mrb[0].mxu0
      %v1403 = vadd.f32 %v1319, %v1402
      %v1404 = vpop.f32.mrb[0].mxu0
      %1405 = vdwg.mxu0
      %v1406 = vadd.f32 %v1388, 2.0
      %v1407 = vadd.f32 %v1393, 2.0
      %v1408 = vadd.f32 %v1398, 2.0
      %v1409 = vadd.f32 %v1403, 2.0
      %v1410 = vxor.u32 %v1406, 2147483648
      %v1411 = vxor.u32 %v1407, 2147483648
      %v1412 = vxor.u32 %v1408, 2147483648
      %v1413 = vxor.u32 %v1409, 2147483648
      %v1414 = vmul.f32 %v1410, 1.442695
      %v1415 = vpow.pop %v1414
      %v1416 = vmul.f32 %v1411, 1.442695
      %v1417 = vpow.pop %v1416
      %v1418 = vmul.f32 %v1412, 1.442695
      %v1419 = vpow.pop %v1418
      %v1420 = vmul.f32 %v1413, 1.442695
      %v1421 = vpow.pop %v1420
      %v1422 = vadd.f32 %v1415, 1.0
      %v1423 = vadd.f32 %v1417, 1.0
      %v1424 = vadd.f32 %v1419, 1.0
      %v1425 = vadd.f32 %v1421, 1.0
      %v1426 = vrcp.pop %v1422
      %v1427 = vmul.f32 1.0, %v1426
      %v1428 = vrcp.pop %v1423
      %v1429 = vmul.f32 1.0, %v1428
      %v1430 = vrcp.pop %v1424
      %v1431 = vmul.f32 1.0, %v1430
      %v1432 = vrcp.pop %v1425
      %v1433 = vmul.f32 1.0, %v1432
      %v1434 = vadd.f32 %v1427, 1e-06
      %v1435 = vadd.f32 %v1429, 1e-06
      %v1436 = vadd.f32 %v1431, 1e-06
      %v1437 = vadd.f32 %v1433, 1e-06
      %v1438 = vld [vmem:[%s1] sm:$0x1]
      %v1439 = vsub.f32 %v1434, 1.0
      %v1440 = vsub.f32 %v1435, 1.0
      %v1441 = vsub.f32 %v1436, 1.0
      %v1442 = vsub.f32 %v1437, 1.0
      %v1444 = vlaneseq
      %v1445 = vshrl.u32 %v1444, 7
      %v1446 = vsub.s32 0, %v1445
      %v1447 = vrot.slane %v1438, %v1446
      %v1449 = vmul.f32 %v1447, %v1439
      %v1450 = vmul.f32 %v1447, %v1440
      %v1451 = vmul.f32 %v1447, %v1441
      %v1452 = vmul.f32 %v1447, %v1442
      %v1453 = vadd.f32 %v1449, 1.0
      %v1454 = vadd.f32 %v1450, 1.0
      %v1455 = vadd.f32 %v1451, 1.0
      %v1456 = vadd.f32 %v1452, 1.0
      %v1457 = vadd.f32 %v839, %v1280
      %v1458 = vadd.f32 %v844, %v1285
      %v1459 = vadd.f32 %v849, %v1290
      %v1460 = vadd.f32 %v854, %v1295
      %v1461 = vmul.f32 %v1457, %v1453
      %v1462 = vmul.f32 %v1458, %v1454
      %v1463 = vmul.f32 %v1459, %v1455
      %v1464 = vmul.f32 %v1460, %v1456
      %v1465 = vld [vmem:[%s0] sm:$0xff]
      %v1466 = vlog2.pop %v1453
      %v1467 = vmul.f32 %v1466, 0.6931472
      %v1468 = vlog2.pop %v1454
      %v1469 = vmul.f32 %v1468, 0.6931472
      %v1470 = vlog2.pop %v1455
      %v1471 = vmul.f32 %v1470, 0.6931472
      %v1472 = vlog2.pop %v1456
      %v1473 = vmul.f32 %v1472, 0.6931472
      %vm1474 = vcmask 261120
      %v1476 = vsel %vm1474, %v1465, 0
      %1478 = vmatprep.subr.mxu0 0.0
      %1479 = vmatpush1.msra.mxu0 %v1467
      %1480 = vmatprep.subr.mxu0 0.0
      %1481 = vmatpush1.msra.mxu0 %v1469
      %1482 = vmatprep.subr.mxu0 0.0
      %1483 = vmatpush1.msra.mxu0 %v1471
      %1484 = vmatprep.subr.mxu0 0.0
      %1485 = vmatpush1.msra.mxu0 %v1473
      %1486 = vmatprep.subr.mxu0 0.0
      %1487 = vmatpush1.msra.mxu0 0.0
      %1488 = vmatprep.subr.mxu0 0.0
      %1489 = vmatpush1.msra.mxu0 0.0
      %1490 = vmatprep.subr.mxu0 0.0
      %1491 = vmatpush1.msra.mxu0 0.0
      %1492 = vmatprep.subr.mxu0 0.0
      %1493 = vmatpush1.msra.mxu0 0.0
      %1494 = vmatprep.subr.mxu0 0.0
      %1495 = vmatpush1.msra.mxu0 0.0
      %1496 = vmatprep.subr.mxu0 0.0
      %1497 = vmatpush1.msra.mxu0 0.0
      %1498 = vmatprep.subr.mxu0 0.0
      %1499 = vmatpush1.msra.mxu0 0.0
      %1500 = vmatprep.subr.mxu0 0.0
      %1501 = vmatpush1.msra.mxu0 0.0
      %1502 = vmatprep.subr.mxu0 0.0
      %1503 = vmatpush1.msra.mxu0 0.0
      %1504 = vmatprep.subr.mxu0 0.0
      %1505 = vmatpush1.msra.mxu0 0.0
      %1506 = vmatprep.subr.mxu0 0.0
      %1507 = vmatpush1.msra.mxu0 0.0
      %1508 = vmatprep.subr.mxu0 0.0
      %1509 = vmatpush1.msra.mxu0 0.0
      %1510 = vmatprep.subr.mxu0 0.0
      %1511 = vmatpush1.msra.mxu0 0.0
      %1512 = vmatprep.subr.mxu0 0.0
      %1513 = vmatpush1.msra.mxu0 0.0
      %1514 = vmatprep.subr.mxu0 0.0
      %1515 = vmatpush1.msra.mxu0 0.0
      %1516 = vmatprep.subr.mxu0 0.0
      %1517 = vmatpush1.msra.mxu0 0.0
      %1518 = vmatprep.subr.mxu0 0.0
      %1519 = vmatpush1.msra.mxu0 0.0
      %1520 = vmatprep.subr.mxu0 0.0
      %1521 = vmatpush1.msra.mxu0 0.0
      %1522 = vmatprep.subr.mxu0 0.0
      %1523 = vmatpush1.msra.mxu0 0.0
      %1524 = vmatprep.subr.mxu0 0.0
      %1525 = vmatpush1.msra.mxu0 0.0
      %1526 = vmatprep.subr.mxu0 0.0
      %1527 = vmatpush1.msra.mxu0 0.0
      %1528 = vmatprep.subr.mxu0 0.0
      %1529 = vmatpush1.msra.mxu0 0.0
      %1530 = vmatprep.subr.mxu0 0.0
      %1531 = vmatpush1.msra.mxu0 0.0
      %1532 = vmatprep.subr.mxu0 0.0
      %1533 = vmatpush1.msra.mxu0 0.0
      %1534 = vmatprep.subr.mxu0 0.0
      %1535 = vmatpush1.msra.mxu0 0.0
      %1536 = vmatprep.subr.mxu0 0.0
      %1537 = vmatpush1.msra.mxu0 0.0
      %1538 = vmatprep.subr.mxu0 0.0
      %1539 = vmatpush1.msra.mxu0 0.0
      %1540 = vmatprep.subr.mxu0 0.0
      %1541 = vmatpush1.msra.mxu0 0.0
      %1542 = vmatprep.mubr.f32.mxu0 0.0
      %1543 = vmatmul.mubr.f32.gmra.mrb[0].mxu0 %v1476
      %v1544 = vpop.f32.mrb[0].mxu0
      %v1545 = vadd.f32 0.0, %v1544
      %v1546 = vpop.f32.mrb[0].mxu0
      %1547 = vdwg.mxu0
      %v1548 = vld [vmem:[#allocation3] sm:$0xff]
      %1549 = vadd.xlane.f32.xlu0 %v1545
      %v1550 = vpop.xlane.xlu0 %1549
      %v1551 = vadd.f32 %v1548, %v1550
      %1552 = vst [vmem:[#allocation2] sm:$0xff] %v1461
      %1553 = vst [vmem:[#allocation2 + $0x8] sm:$0xff] %v1462
      %1554 = vst [vmem:[#allocation2 + $0x10] sm:$0xff] %v1463
      %1555 = vst [vmem:[#allocation2 + $0x18] sm:$0xff] %v1464
      %vm1556 = vcmask 7168
      %1557 = vst.msk [vmem:[#allocation3] sm:$0xff] %vm1556, %v1551
      %p1558 = scmp.eq.s32.totalorder %s29, 2
      // Predicated region
      $region89: #{flownet_forward.1} parent=83 // pred_check
        %p1559 = pneg %p1558
      $region90: #{flownet_forward.1} parent=83 // pred_check_branch
        %1561 = sbr.rel (%p1559) target = $region92
      $region91: #{flownet_forward.1} parent=83 // pred_region
        %1562 = vst [vmem:[%s16] sm:$0xff] %v1461
        %1563 = vst [vmem:[%s16 + $0x8] sm:$0xff] %v1462
        %1564 = vst [vmem:[%s16 + $0x10] sm:$0xff] %v1463
        %1565 = vst [vmem:[%s16 + $0x18] sm:$0xff] %v1464
        %1566 = vst.msk [vmem:[%s17] sm:$0xff] %vm1556, %v1551
      $region92: #{flownet_forward.1} parent=83 // pred_fallthru
        _
      // Predicated region
      $region93: #{flownet_forward.1} parent=83 // pred_check
        %p1567 = pneg %p438
      $region94: #{flownet_forward.1} parent=83 // pred_check_branch
        %1569 = sbr.rel (%p1567) target = $region96
      $region95: #{flownet_forward.1} parent=83 // pred_region
        _
      $region96: #{flownet_forward.1} parent=83 // pred_fallthru
        _
      // Predicated region
      $region97: #{flownet_forward.1} parent=83 // pred_check
        %p1570 = pneg %p459
      $region98: #{flownet_forward.1} parent=83 // pred_check_branch
        %1572 = sbr.rel (%p1570) target = $region100
      $region99: #{flownet_forward.1} parent=83 // pred_region
        _
      $region100: #{flownet_forward.1} parent=83 // pred_fallthru
        _
      // Predicated region
      $region101: #{flownet_forward.1} parent=83 // pred_check
        %p1573 = pneg %p438
      $region102: #{flownet_forward.1} parent=83 // pred_check_branch
        %1575 = sbr.rel (%p1573) target = $region104
      $region103: #{flownet_forward.1} parent=83 // pred_region
        _
      $region104: #{flownet_forward.1} parent=83 // pred_fallthru
        _
      // Predicated region
      $region105: #{flownet_forward.1} parent=83 // pred_check
        %p1576 = pneg %p459
      $region106: #{flownet_forward.1} parent=83 // pred_check_branch
        %1578 = sbr.rel (%p1576) target = $region108
      $region107: #{flownet_forward.1} parent=83 // pred_region
        _
      $region108: #{flownet_forward.1} parent=83 // pred_fallthru
        _
    $region84: #{flownet_forward.1} parent=5 // pred_fallthru
      _
    %p1579 = scmp.le.s32.totalorder 2, %s24
    // Predicated region
    $region109: #{flownet_forward.1} parent=5 // pred_check
      %p1580 = pneg %p1579
    $region110: #{flownet_forward.1} parent=5 // pred_check_branch
      %1582 = sbr.rel (%p1580) target = $region112
    $region111: #{flownet_forward.1} parent=5 // pred_region
      %s1583 = ssub.s32 %s24, 2
    $region112: #{flownet_forward.1} parent=5 // pred_fallthru
      _
  $region6: #{flownet_forward.1} parent=0 // loop_footer
    %s28 = sadd.s32 1, %s24
  $region7: #{flownet_forward.1} parent=0 // loop_footer_branch
    %23 = sbr.rel target = $region3
  $region8: #{flownet_forward.1} parent=0 // loop_exit
    _

</llo_original>
